<compile_context>
chip_gen: v7x
topology: tpu7x:2x2x1
jax: 0.10.0
libtpu: 0.0.40
codegen_flags: <defaults>
</compile_context>

<pallas_src>
import functools

import jax
import jax.numpy as jnp
from jax import lax
from jax.experimental import pallas as pl
from jax.experimental.pallas import tpu as pltpu


def _round_up(x, m):
    return (x + m - 1) // m * m


def _spatial_attention_kernel(H, W, K, WL, RT, num_rt,
                              w_ref, x_ref, out_ref, feat_ref):
    """Grid = (B, num_c_tiles); one (batch, channel-tile) step per invocation.

    w_ref   : SMEM (2*K*K,) f32     conv weights, [avg (already /C), max] x [kh, kw]
    x_ref   : VMEM (Ct, H, W)       raw input channels for this tile (any float dtype)
    out_ref : VMEM (H, W) f32       sigmoid(conv) output (written on last C step)
    feat_ref: VMEM (2, Hp, WL) f32  zero-padded [sum, max] maps; data at rows
                                    [pad, pad+H), cols [pad, pad+W); border stays 0.
    """
    pad = K // 2
    Hp = H + 2 * pad
    c_idx = pl.program_id(1)
    last_c = pl.num_programs(1) - 1

    # ---- channel reduction for this C tile (accumulate in f32) ---------------
    x = x_ref[...].astype(jnp.float32)            # (Ct, H, W)
    part_sum = jnp.sum(x, axis=0)                 # (H, W)
    part_max = jnp.max(x, axis=0)                 # (H, W)

    @pl.when(c_idx == 0)
    def _init():
        # Zero only the padding border (the interior is overwritten right below).
        # Done at every batch element's first C step -> megacore-safe; re-zeroing an
        # already-zero border is idempotent and cheap.
        zrow = jnp.zeros((pad, WL), jnp.float32)
        zcl = jnp.zeros((Hp, pad), jnp.float32)
        zcr = jnp.zeros((Hp, WL - pad - W), jnp.float32)
        for ch in range(2):
            feat_ref[ch, pl.ds(0, pad), pl.ds(0, WL)] = zrow
            feat_ref[ch, pl.ds(pad + H, pad), pl.ds(0, WL)] = zrow
            feat_ref[ch, pl.ds(0, Hp), pl.ds(0, pad)] = zcl
            feat_ref[ch, pl.ds(0, Hp), pl.ds(pad + W, WL - pad - W)] = zcr
        feat_ref[0, pl.ds(pad, H), pl.ds(pad, W)] = part_sum
        feat_ref[1, pl.ds(pad, H), pl.ds(pad, W)] = part_max

    @pl.when(c_idx > 0)
    def _accumulate():
        cur_sum = feat_ref[0, pl.ds(pad, H), pl.ds(pad, W)]
        cur_max = feat_ref[1, pl.ds(pad, H), pl.ds(pad, W)]
        feat_ref[0, pl.ds(pad, H), pl.ds(pad, W)] = cur_sum + part_sum
        feat_ref[1, pl.ds(pad, H), pl.ds(pad, W)] = jnp.maximum(cur_max, part_max)

    # ---- 7x7 conv + sigmoid over the reduced maps (last C step only) ---------
    @pl.when(c_idx == last_c)
    def _conv():
        @pl.loop(0, num_rt)
        def _row_tile(i):
            # Clamp so a ragged last tile recomputes a few rows instead of OOB.
            r0 = jnp.minimum(i * RT, H - RT)
            acc = jnp.zeros((RT, W), jnp.float32)
            for ch in range(2):
                for dh in range(K):
                    # One lane-aligned load per (channel, dh); the dw shift is a
                    # static in-register lane slice of this value.
                    slab = feat_ref[ch, pl.ds(r0 + dh, RT), pl.ds(0, WL)]
                    for dw in range(K):
                        wgt = w_ref[ch * K * K + dh * K + dw]   # SMEM scalar
                        acc = acc + wgt * lax.slice_in_dim(slab, dw, dw + W, axis=1)
            out_ref[pl.ds(r0, RT), pl.ds(0, W)] = jax.nn.sigmoid(acc)


def spatial_attention(x, weight, kernel_size=7, c_tile=None):
    """x: (B, C, H, W) float (f32 or bf16); weight: (1, 2, K, K) torch Conv2d layout.

    Returns sigmoid(conv2d(cat([mean_c(x), max_c(x)], 1), weight)) of shape
    (B, 1, H, W), float32."""
    B, C, H, W = x.shape
    K = kernel_size
    pad = K // 2
    Hp = H + 2 * pad
    WL = _round_up(W + 2 * pad, 128)      # lane-aligned scratch width

    if c_tile is None:
        c_tile = 1
        for d in range(1, min(C, 16) + 1):
            if C % d == 0:
                c_tile = d
    assert C % c_tile == 0, "c_tile must divide C"
    n_ct = C // c_tile

    RT = min(8, H)                         # conv row tile (bounds the live acc)
    num_rt = -(-H // RT)

    # Fold 1/C into the avg-channel weights (kernel keeps a channel *sum*).
    w_avg = (weight[0, 0].astype(jnp.float32) / C).reshape(-1)
    w_max = weight[0, 1].astype(jnp.float32).reshape(-1)
    w_flat = jnp.concatenate([w_avg, w_max])          # (2*K*K,)

    kern = functools.partial(_spatial_attention_kernel, H, W, K, WL, RT, num_rt)

    # Generation-aware VMEM budget: double-buffered input + output blocks + scratch
    # + headroom, clamped so it also fits v7x's 64 MiB physical VMEM.
    in_bytes = 2 * c_tile * H * W * x.dtype.itemsize
    out_bytes = 2 * H * W * 4
    scratch_bytes = 2 * Hp * WL * 4
    vmem_limit = int(min(max(in_bytes + out_bytes + scratch_bytes + (8 << 20),
                             16 << 20), 48 << 20))

    out = pl.pallas_call(
        kern,
        out_shape=jax.ShapeDtypeStruct((B, H, W), jnp.float32),
        grid_spec=pltpu.PrefetchScalarGridSpec(
            num_scalar_prefetch=0,
            grid=(B, n_ct),
            in_specs=[
                pl.BlockSpec(memory_space=pltpu.MemorySpace.SMEM),          # weights
                pl.BlockSpec((None, c_tile, H, W), lambda b, c: (b, c, 0, 0)),
            ],
            out_specs=pl.BlockSpec((None, H, W), lambda b, c: (b, 0, 0)),
            scratch_shapes=[
                pltpu.VMEM((2, Hp, WL), jnp.float32),   # padded [sum, max] maps
            ]),
        compiler_params=pltpu.CompilerParams(
            dimension_semantics=("parallel", "arbitrary"),   # batch parallel, C reduce
            vmem_limit_bytes=vmem_limit),
    )(w_flat, x)

    return out[:, None]                                  # (B, 1, H, W)


def spatial_attention_ref(x, weight, kernel_size=7):
    """Pure-JAX reference matching the PyTorch module (computed in f32)."""
    pad = kernel_size // 2
    xf = x.astype(jnp.float32)
    avg = jnp.mean(xf, axis=1, keepdims=True)
    mx = jnp.max(xf, axis=1, keepdims=True)
    feat = jnp.concatenate([avg, mx], axis=1)             # (B, 2, H, W)
    y = lax.conv_general_dilated(
        feat, weight.astype(jnp.float32),
        window_strides=(1, 1), padding=((pad, pad), (pad, pad)),
        dimension_numbers=("NCHW", "OIHW", "NCHW"),
        precision=lax.Precision.HIGHEST)
    return jax.nn.sigmoid(y)


if __name__ == "__main__":
    key = jax.random.PRNGKey(0)
    B, C, H, W, K = 2, 4, 16, 16, 7
    kx, kw = jax.random.split(key)

    # bf16 activation (the kernel DMAs the source dtype directly); f32 weights.
    x = jax.random.normal(kx, (B, C, H, W), jnp.float32).astype(jnp.bfloat16)
    # PyTorch default Conv2d init: U(-1/sqrt(fan_in), 1/sqrt(fan_in)), fan_in = 2*K*K.
    fan_in = 2 * K * K
    bound = 1.0 / (fan_in ** 0.5)
    weight = jax.random.uniform(kw, (1, 2, K, K), jnp.float32,
                                minval=-bound, maxval=bound)

    fn = jax.jit(functools.partial(spatial_attention, kernel_size=K, c_tile=2))
    out = fn(x, weight)
    jax.block_until_ready(out)

    ref = spatial_attention_ref(x, weight, kernel_size=K)

    assert out.shape == (B, 1, H, W)
    assert bool(jnp.all(jnp.isfinite(out)))
    err = float(jnp.max(jnp.abs(out - ref)))
    assert bool(jnp.allclose(out, ref, atol=2e-5, rtol=2e-5)), err
    print("KERNEL_OK")
</pallas_src>

<mosaic_0001>
module attributes {stable_mosaic.version = 11 : i64} {
  func.func @_spatial_attention_kernel(%arg0: i32, %arg1: i32, %arg2: memref<98xf32, #tpu.memory_space<smem>>, %arg3: memref<1x2x16x16xbf16, #tpu.memory_space<vmem>>, %arg4: memref<1x16x16xf32, #tpu.memory_space<vmem>>, %arg5: memref<2x22x128xf32, #tpu.memory_space<vmem>>) attributes {dimension_semantics = [#tpu.dimension_semantics<parallel>, #tpu.dimension_semantics<arbitrary>], iteration_bounds = array<i64: 2, 2>, scalar_prefetch = 0 : i64, scratch_operands = 1 : i64, tpu.core_type = #tpu.core_type<tc>, window_params = [{transform_indices = @transform_0, window_bounds = array<i64: 98>}, {transform_indices = @transform_1, window_bounds = array<i64: 1, 2, 16, 16>}, {transform_indices = @transform_2, window_bounds = array<i64: 1, 16, 16>}]} {
    %c0 = arith.constant 0 : index
    %c0_0 = arith.constant 0 : index
    %c0_1 = arith.constant 0 : index
    %c0_2 = arith.constant 0 : index
    %0 = vector.load %arg3[%c0, %c0_0, %c0_1, %c0_2] : memref<1x2x16x16xbf16, #tpu.memory_space<vmem>>, vector<1x2x16x16xbf16>
    %1 = vector.shape_cast %0 : vector<1x2x16x16xbf16> to vector<2x16x16xbf16>
    %2 = arith.extf %1 : vector<2x16x16xbf16> to vector<2x16x16xf32>
    %cst = arith.constant dense<0.000000e+00> : vector<16x16xf32>
    %3 = vector.multi_reduction <add>, %2, %cst [0] : vector<2x16x16xf32> to vector<16x16xf32>
    %cst_3 = arith.constant dense<0xFF800000> : vector<16x16xf32>
    %4 = vector.multi_reduction <maximumf>, %2, %cst_3 [0] : vector<2x16x16xf32> to vector<16x16xf32>
    %c0_i32 = arith.constant 0 : i32
    %5 = arith.cmpi eq, %arg1, %c0_i32 : i32
    %6 = arith.extui %5 : i1 to i32
    %c0_i32_4 = arith.constant 0 : i32
    %7 = arith.cmpi ne, %6, %c0_i32_4 : i32
    scf.if %7 {
      %cst_8 = arith.constant 0.000000e+00 : f32
      %14 = vector.broadcast %cst_8 : f32 to vector<3x128xf32>
      %cst_9 = arith.constant 0.000000e+00 : f32
      %15 = vector.broadcast %cst_9 : f32 to vector<22x3xf32>
      %cst_10 = arith.constant 0.000000e+00 : f32
      %16 = vector.broadcast %cst_10 : f32 to vector<22x109xf32>
      %c0_11 = arith.constant 0 : index
      %c0_12 = arith.constant 0 : index
      %c0_13 = arith.constant 0 : index
      %17 = vector.load %arg5[%c0_11, %c0_12, %c0_13] : memref<2x22x128xf32, #tpu.memory_space<vmem>>, vector<1x3x128xf32>
      %18 = vector.shape_cast %17 : vector<1x3x128xf32> to vector<3x128xf32>
      %19 = vector.shape_cast %14 : vector<3x128xf32> to vector<1x3x128xf32>
      tpu.vector_store %arg5[%c0_11, %c0_12, %c0_13], %19 {strides = array<i32>} : memref<2x22x128xf32, #tpu.memory_space<vmem>>, vector<1x3x128xf32>,
      %c0_14 = arith.constant 0 : index
      %c19 = arith.constant 19 : index
      %c0_15 = arith.constant 0 : index
      %20 = vector.load %arg5[%c0_14, %c19, %c0_15] : memref<2x22x128xf32, #tpu.memory_space<vmem>>, vector<1x3x128xf32>
      %21 = vector.shape_cast %20 : vector<1x3x128xf32> to vector<3x128xf32>
      %22 = vector.shape_cast %14 : vector<3x128xf32> to vector<1x3x128xf32>
      tpu.vector_store %arg5[%c0_14, %c19, %c0_15], %22 {strides = array<i32>} : memref<2x22x128xf32, #tpu.memory_space<vmem>>, vector<1x3x128xf32>,
      %c0_16 = arith.constant 0 : index
      %c0_17 = arith.constant 0 : index
      %c0_18 = arith.constant 0 : index
      %23 = vector.load %arg5[%c0_16, %c0_17, %c0_18] : memref<2x22x128xf32, #tpu.memory_space<vmem>>, vector<1x22x3xf32>
      %24 = vector.shape_cast %23 : vector<1x22x3xf32> to vector<22x3xf32>
      %25 = vector.shape_cast %15 : vector<22x3xf32> to vector<1x22x3xf32>
      tpu.vector_store %arg5[%c0_16, %c0_17, %c0_18], %25 {strides = array<i32>} : memref<2x22x128xf32, #tpu.memory_space<vmem>>, vector<1x22x3xf32>,
      %c0_19 = arith.constant 0 : index
      %c0_20 = arith.constant 0 : index
      %c19_21 = arith.constant 19 : index
      %26 = vector.load %arg5[%c0_19, %c0_20, %c19_21] : memref<2x22x128xf32, #tpu.memory_space<vmem>>, vector<1x22x109xf32>
      %27 = vector.shape_cast %26 : vector<1x22x109xf32> to vector<22x109xf32>
      %28 = vector.shape_cast %16 : vector<22x109xf32> to vector<1x22x109xf32>
      tpu.vector_store %arg5[%c0_19, %c0_20, %c19_21], %28 {strides = array<i32>} : memref<2x22x128xf32, #tpu.memory_space<vmem>>, vector<1x22x109xf32>,
      %c1 = arith.constant 1 : index
      %c0_22 = arith.constant 0 : index
      %c0_23 = arith.constant 0 : index
      %29 = vector.load %arg5[%c1, %c0_22, %c0_23] : memref<2x22x128xf32, #tpu.memory_space<vmem>>, vector<1x3x128xf32>
      %30 = vector.shape_cast %29 : vector<1x3x128xf32> to vector<3x128xf32>
      %31 = vector.shape_cast %14 : vector<3x128xf32> to vector<1x3x128xf32>
      tpu.vector_store %arg5[%c1, %c0_22, %c0_23], %31 {strides = array<i32>} : memref<2x22x128xf32, #tpu.memory_space<vmem>>, vector<1x3x128xf32>,
      %c1_24 = arith.constant 1 : index
      %c19_25 = arith.constant 19 : index
      %c0_26 = arith.constant 0 : index
      %32 = vector.load %arg5[%c1_24, %c19_25, %c0_26] : memref<2x22x128xf32, #tpu.memory_space<vmem>>, vector<1x3x128xf32>
      %33 = vector.shape_cast %32 : vector<1x3x128xf32> to vector<3x128xf32>
      %34 = vector.shape_cast %14 : vector<3x128xf32> to vector<1x3x128xf32>
      tpu.vector_store %arg5[%c1_24, %c19_25, %c0_26], %34 {strides = array<i32>} : memref<2x22x128xf32, #tpu.memory_space<vmem>>, vector<1x3x128xf32>,
      %c1_27 = arith.constant 1 : index
      %c0_28 = arith.constant 0 : index
      %c0_29 = arith.constant 0 : index
      %35 = vector.load %arg5[%c1_27, %c0_28, %c0_29] : memref<2x22x128xf32, #tpu.memory_space<vmem>>, vector<1x22x3xf32>
      %36 = vector.shape_cast %35 : vector<1x22x3xf32> to vector<22x3xf32>
      %37 = vector.shape_cast %15 : vector<22x3xf32> to vector<1x22x3xf32>
      tpu.vector_store %arg5[%c1_27, %c0_28, %c0_29], %37 {strides = array<i32>} : memref<2x22x128xf32, #tpu.memory_space<vmem>>, vector<1x22x3xf32>,
      %c1_30 = arith.constant 1 : index
      %c0_31 = arith.constant 0 : index
      %c19_32 = arith.constant 19 : index
      %38 = vector.load %arg5[%c1_30, %c0_31, %c19_32] : memref<2x22x128xf32, #tpu.memory_space<vmem>>, vector<1x22x109xf32>
      %39 = vector.shape_cast %38 : vector<1x22x109xf32> to vector<22x109xf32>
      %40 = vector.shape_cast %16 : vector<22x109xf32> to vector<1x22x109xf32>
      tpu.vector_store %arg5[%c1_30, %c0_31, %c19_32], %40 {strides = array<i32>} : memref<2x22x128xf32, #tpu.memory_space<vmem>>, vector<1x22x109xf32>,
      %c0_33 = arith.constant 0 : index
      %c3 = arith.constant 3 : index
      %c3_34 = arith.constant 3 : index
      %41 = vector.load %arg5[%c0_33, %c3, %c3_34] : memref<2x22x128xf32, #tpu.memory_space<vmem>>, vector<1x16x16xf32>
      %42 = vector.shape_cast %41 : vector<1x16x16xf32> to vector<16x16xf32>
      %43 = vector.shape_cast %3 : vector<16x16xf32> to vector<1x16x16xf32>
      tpu.vector_store %arg5[%c0_33, %c3, %c3_34], %43 {strides = array<i32>} : memref<2x22x128xf32, #tpu.memory_space<vmem>>, vector<1x16x16xf32>,
      %c1_35 = arith.constant 1 : index
      %c3_36 = arith.constant 3 : index
      %c3_37 = arith.constant 3 : index
      %44 = vector.load %arg5[%c1_35, %c3_36, %c3_37] : memref<2x22x128xf32, #tpu.memory_space<vmem>>, vector<1x16x16xf32>
      %45 = vector.shape_cast %44 : vector<1x16x16xf32> to vector<16x16xf32>
      %46 = vector.shape_cast %4 : vector<16x16xf32> to vector<1x16x16xf32>
      tpu.vector_store %arg5[%c1_35, %c3_36, %c3_37], %46 {strides = array<i32>} : memref<2x22x128xf32, #tpu.memory_space<vmem>>, vector<1x16x16xf32>,
    } else {
    }
    %c0_i32_5 = arith.constant 0 : i32
    %8 = arith.cmpi sgt, %arg1, %c0_i32_5 : i32
    %9 = arith.extui %8 : i1 to i32
    %c0_i32_6 = arith.constant 0 : i32
    %10 = arith.cmpi ne, %9, %c0_i32_6 : i32
    scf.if %10 {
      %c0_8 = arith.constant 0 : index
      %c3 = arith.constant 3 : index
      %c3_9 = arith.constant 3 : index
      %14 = vector.load %arg5[%c0_8, %c3, %c3_9] : memref<2x22x128xf32, #tpu.memory_space<vmem>>, vector<1x16x16xf32>
      %15 = vector.shape_cast %14 : vector<1x16x16xf32> to vector<16x16xf32>
      %c1 = arith.constant 1 : index
      %c3_10 = arith.constant 3 : index
      %c3_11 = arith.constant 3 : index
      %16 = vector.load %arg5[%c1, %c3_10, %c3_11] : memref<2x22x128xf32, #tpu.memory_space<vmem>>, vector<1x16x16xf32>
      %17 = vector.shape_cast %16 : vector<1x16x16xf32> to vector<16x16xf32>
      %18 = arith.addf %15, %3 : vector<16x16xf32>
      %c0_12 = arith.constant 0 : index
      %c3_13 = arith.constant 3 : index
      %c3_14 = arith.constant 3 : index
      %19 = vector.load %arg5[%c0_12, %c3_13, %c3_14] : memref<2x22x128xf32, #tpu.memory_space<vmem>>, vector<1x16x16xf32>
      %20 = vector.shape_cast %19 : vector<1x16x16xf32> to vector<16x16xf32>
      %21 = vector.shape_cast %18 : vector<16x16xf32> to vector<1x16x16xf32>
      tpu.vector_store %arg5[%c0_12, %c3_13, %c3_14], %21 {strides = array<i32>} : memref<2x22x128xf32, #tpu.memory_space<vmem>>, vector<1x16x16xf32>,
      %22 = arith.maximumf %17, %4 : vector<16x16xf32>
      %c1_15 = arith.constant 1 : index
      %c3_16 = arith.constant 3 : index
      %c3_17 = arith.constant 3 : index
      %23 = vector.load %arg5[%c1_15, %c3_16, %c3_17] : memref<2x22x128xf32, #tpu.memory_space<vmem>>, vector<1x16x16xf32>
      %24 = vector.shape_cast %23 : vector<1x16x16xf32> to vector<16x16xf32>
      %25 = vector.shape_cast %22 : vector<16x16xf32> to vector<1x16x16xf32>
      tpu.vector_store %arg5[%c1_15, %c3_16, %c3_17], %25 {strides = array<i32>} : memref<2x22x128xf32, #tpu.memory_space<vmem>>, vector<1x16x16xf32>,
    } else {
    }
    %c1_i32 = arith.constant 1 : i32
    %11 = arith.cmpi eq, %arg1, %c1_i32 : i32
    %12 = arith.extui %11 : i1 to i32
    %c0_i32_7 = arith.constant 0 : i32
    %13 = arith.cmpi ne, %12, %c0_i32_7 : i32
    scf.if %13 {
      %c0_i32_8 = arith.constant 0 : i32
      %c2_i32 = arith.constant 2 : i32
      %14 = arith.addi %c0_i32_8, %c2_i32 : i32
      %c1_i32_9 = arith.constant 1 : i32
      scf.for %arg6 = %c0_i32_8 to %14 step %c1_i32_9  : i32 {
        %c1_i32_11 = arith.constant 1 : i32
        %15 = arith.muli %arg6, %c1_i32_11 : i32
        %c0_i32_12 = arith.constant 0 : i32
        %16 = arith.addi %c0_i32_12, %15 : i32
        %c8_i32 = arith.constant 8 : i32
        %17 = arith.muli %16, %c8_i32 : i32
        %c8_i32_13 = arith.constant 8 : i32
        %18 = arith.minsi %17, %c8_i32_13 : i32
        %cst_14 = arith.constant 0.000000e+00 : f32
        %19 = vector.broadcast %cst_14 : f32 to vector<8x16xf32>
        %c0_i32_15 = arith.constant 0 : i32
        %20 = arith.addi %18, %c0_i32_15 : i32
        %c0_16 = arith.constant 0 : index
        %21 = arith.index_cast %20 : i32 to index
        %c0_17 = arith.constant 0 : index
        %22 = vector.load %arg5[%c0_16, %21, %c0_17] : memref<2x22x128xf32, #tpu.memory_space<vmem>>, vector<1x8x128xf32>
        %23 = vector.shape_cast %22 : vector<1x8x128xf32> to vector<8x128xf32>
        %c0_18 = arith.constant 0 : index
        %24 = memref.load %arg2[%c0_18] : memref<98xf32, #tpu.memory_space<smem>>
        %25 = vector.extract_strided_slice %23 {offsets = [0, 0], sizes = [8, 16], strides = [1, 1]} : vector<8x128xf32> to vector<8x16xf32>
        %26 = vector.broadcast %24 : f32 to vector<8x16xf32>
        %27 = arith.mulf %26, %25 : vector<8x16xf32>
        %28 = arith.addf %19, %27 : vector<8x16xf32>
        %c1 = arith.constant 1 : index
        %29 = memref.load %arg2[%c1] : memref<98xf32, #tpu.memory_space<smem>>
        %30 = vector.extract_strided_slice %23 {offsets = [0, 1], sizes = [8, 16], strides = [1, 1]} : vector<8x128xf32> to vector<8x16xf32>
        %31 = vector.broadcast %29 : f32 to vector<8x16xf32>
        %32 = arith.mulf %31, %30 : vector<8x16xf32>
        %33 = arith.addf %28, %32 : vector<8x16xf32>
        %c2 = arith.constant 2 : index
        %34 = memref.load %arg2[%c2] : memref<98xf32, #tpu.memory_space<smem>>
        %35 = vector.extract_strided_slice %23 {offsets = [0, 2], sizes = [8, 16], strides = [1, 1]} : vector<8x128xf32> to vector<8x16xf32>
        %36 = vector.broadcast %34 : f32 to vector<8x16xf32>
        %37 = arith.mulf %36, %35 : vector<8x16xf32>
        %38 = arith.addf %33, %37 : vector<8x16xf32>
        %c3 = arith.constant 3 : index
        %39 = memref.load %arg2[%c3] : memref<98xf32, #tpu.memory_space<smem>>
        %40 = vector.extract_strided_slice %23 {offsets = [0, 3], sizes = [8, 16], strides = [1, 1]} : vector<8x128xf32> to vector<8x16xf32>
        %41 = vector.broadcast %39 : f32 to vector<8x16xf32>
        %42 = arith.mulf %41, %40 : vector<8x16xf32>
        %43 = arith.addf %38, %42 : vector<8x16xf32>
        %c4 = arith.constant 4 : index
        %44 = memref.load %arg2[%c4] : memref<98xf32, #tpu.memory_space<smem>>
        %45 = vector.extract_strided_slice %23 {offsets = [0, 4], sizes = [8, 16], strides = [1, 1]} : vector<8x128xf32> to vector<8x16xf32>
        %46 = vector.broadcast %44 : f32 to vector<8x16xf32>
        %47 = arith.mulf %46, %45 : vector<8x16xf32>
        %48 = arith.addf %43, %47 : vector<8x16xf32>
        %c5 = arith.constant 5 : index
        %49 = memref.load %arg2[%c5] : memref<98xf32, #tpu.memory_space<smem>>
        %50 = vector.extract_strided_slice %23 {offsets = [0, 5], sizes = [8, 16], strides = [1, 1]} : vector<8x128xf32> to vector<8x16xf32>
        %51 = vector.broadcast %49 : f32 to vector<8x16xf32>
        %52 = arith.mulf %51, %50 : vector<8x16xf32>
        %53 = arith.addf %48, %52 : vector<8x16xf32>
        %c6 = arith.constant 6 : index
        %54 = memref.load %arg2[%c6] : memref<98xf32, #tpu.memory_space<smem>>
        %55 = vector.extract_strided_slice %23 {offsets = [0, 6], sizes = [8, 16], strides = [1, 1]} : vector<8x128xf32> to vector<8x16xf32>
        %56 = vector.broadcast %54 : f32 to vector<8x16xf32>
        %57 = arith.mulf %56, %55 : vector<8x16xf32>
        %58 = arith.addf %53, %57 : vector<8x16xf32>
        %c1_i32_19 = arith.constant 1 : i32
        %59 = arith.addi %18, %c1_i32_19 : i32
        %c0_20 = arith.constant 0 : index
        %60 = arith.index_cast %59 : i32 to index
        %c0_21 = arith.constant 0 : index
        %61 = vector.load %arg5[%c0_20, %60, %c0_21] : memref<2x22x128xf32, #tpu.memory_space<vmem>>, vector<1x8x128xf32>
        %62 = vector.shape_cast %61 : vector<1x8x128xf32> to vector<8x128xf32>
        %c7 = arith.constant 7 : index
        %63 = memref.load %arg2[%c7] : memref<98xf32, #tpu.memory_space<smem>>
        %64 = vector.extract_strided_slice %62 {offsets = [0, 0], sizes = [8, 16], strides = [1, 1]} : vector<8x128xf32> to vector<8x16xf32>
        %65 = vector.broadcast %63 : f32 to vector<8x16xf32>
        %66 = arith.mulf %65, %64 : vector<8x16xf32>
        %67 = arith.addf %58, %66 : vector<8x16xf32>
        %c8 = arith.constant 8 : index
        %68 = memref.load %arg2[%c8] : memref<98xf32, #tpu.memory_space<smem>>
        %69 = vector.extract_strided_slice %62 {offsets = [0, 1], sizes = [8, 16], strides = [1, 1]} : vector<8x128xf32> to vector<8x16xf32>
        %70 = vector.broadcast %68 : f32 to vector<8x16xf32>
        %71 = arith.mulf %70, %69 : vector<8x16xf32>
        %72 = arith.addf %67, %71 : vector<8x16xf32>
        %c9 = arith.constant 9 : index
        %73 = memref.load %arg2[%c9] : memref<98xf32, #tpu.memory_space<smem>>
        %74 = vector.extract_strided_slice %62 {offsets = [0, 2], sizes = [8, 16], strides = [1, 1]} : vector<8x128xf32> to vector<8x16xf32>
        %75 = vector.broadcast %73 : f32 to vector<8x16xf32>
        %76 = arith.mulf %75, %74 : vector<8x16xf32>
        %77 = arith.addf %72, %76 : vector<8x16xf32>
        %c10 = arith.constant 10 : index
        %78 = memref.load %arg2[%c10] : memref<98xf32, #tpu.memory_space<smem>>
        %79 = vector.extract_strided_slice %62 {offsets = [0, 3], sizes = [8, 16], strides = [1, 1]} : vector<8x128xf32> to vector<8x16xf32>
        %80 = vector.broadcast %78 : f32 to vector<8x16xf32>
        %81 = arith.mulf %80, %79 : vector<8x16xf32>
        %82 = arith.addf %77, %81 : vector<8x16xf32>
        %c11 = arith.constant 11 : index
        %83 = memref.load %arg2[%c11] : memref<98xf32, #tpu.memory_space<smem>>
        %84 = vector.extract_strided_slice %62 {offsets = [0, 4], sizes = [8, 16], strides = [1, 1]} : vector<8x128xf32> to vector<8x16xf32>
        %85 = vector.broadcast %83 : f32 to vector<8x16xf32>
        %86 = arith.mulf %85, %84 : vector<8x16xf32>
        %87 = arith.addf %82, %86 : vector<8x16xf32>
        %c12 = arith.constant 12 : index
        %88 = memref.load %arg2[%c12] : memref<98xf32, #tpu.memory_space<smem>>
        %89 = vector.extract_strided_slice %62 {offsets = [0, 5], sizes = [8, 16], strides = [1, 1]} : vector<8x128xf32> to vector<8x16xf32>
        %90 = vector.broadcast %88 : f32 to vector<8x16xf32>
        %91 = arith.mulf %90, %89 : vector<8x16xf32>
        %92 = arith.addf %87, %91 : vector<8x16xf32>
        %c13 = arith.constant 13 : index
        %93 = memref.load %arg2[%c13] : memref<98xf32, #tpu.memory_space<smem>>
        %94 = vector.extract_strided_slice %62 {offsets = [0, 6], sizes = [8, 16], strides = [1, 1]} : vector<8x128xf32> to vector<8x16xf32>
        %95 = vector.broadcast %93 : f32 to vector<8x16xf32>
        %96 = arith.mulf %95, %94 : vector<8x16xf32>
        %97 = arith.addf %92, %96 : vector<8x16xf32>
        %c2_i32_22 = arith.constant 2 : i32
        %98 = arith.addi %18, %c2_i32_22 : i32
        %c0_23 = arith.constant 0 : index
        %99 = arith.index_cast %98 : i32 to index
        %c0_24 = arith.constant 0 : index
        %100 = vector.load %arg5[%c0_23, %99, %c0_24] : memref<2x22x128xf32, #tpu.memory_space<vmem>>, vector<1x8x128xf32>
        %101 = vector.shape_cast %100 : vector<1x8x128xf32> to vector<8x128xf32>
        %c14 = arith.constant 14 : index
        %102 = memref.load %arg2[%c14] : memref<98xf32, #tpu.memory_space<smem>>
        %103 = vector.extract_strided_slice %101 {offsets = [0, 0], sizes = [8, 16], strides = [1, 1]} : vector<8x128xf32> to vector<8x16xf32>
        %104 = vector.broadcast %102 : f32 to vector<8x16xf32>
        %105 = arith.mulf %104, %103 : vector<8x16xf32>
        %106 = arith.addf %97, %105 : vector<8x16xf32>
        %c15 = arith.constant 15 : index
        %107 = memref.load %arg2[%c15] : memref<98xf32, #tpu.memory_space<smem>>
        %108 = vector.extract_strided_slice %101 {offsets = [0, 1], sizes = [8, 16], strides = [1, 1]} : vector<8x128xf32> to vector<8x16xf32>
        %109 = vector.broadcast %107 : f32 to vector<8x16xf32>
        %110 = arith.mulf %109, %108 : vector<8x16xf32>
        %111 = arith.addf %106, %110 : vector<8x16xf32>
        %c16 = arith.constant 16 : index
        %112 = memref.load %arg2[%c16] : memref<98xf32, #tpu.memory_space<smem>>
        %113 = vector.extract_strided_slice %101 {offsets = [0, 2], sizes = [8, 16], strides = [1, 1]} : vector<8x128xf32> to vector<8x16xf32>
        %114 = vector.broadcast %112 : f32 to vector<8x16xf32>
        %115 = arith.mulf %114, %113 : vector<8x16xf32>
        %116 = arith.addf %111, %115 : vector<8x16xf32>
        %c17 = arith.constant 17 : index
        %117 = memref.load %arg2[%c17] : memref<98xf32, #tpu.memory_space<smem>>
        %118 = vector.extract_strided_slice %101 {offsets = [0, 3], sizes = [8, 16], strides = [1, 1]} : vector<8x128xf32> to vector<8x16xf32>
        %119 = vector.broadcast %117 : f32 to vector<8x16xf32>
        %120 = arith.mulf %119, %118 : vector<8x16xf32>
        %121 = arith.addf %116, %120 : vector<8x16xf32>
        %c18 = arith.constant 18 : index
        %122 = memref.load %arg2[%c18] : memref<98xf32, #tpu.memory_space<smem>>
        %123 = vector.extract_strided_slice %101 {offsets = [0, 4], sizes = [8, 16], strides = [1, 1]} : vector<8x128xf32> to vector<8x16xf32>
        %124 = vector.broadcast %122 : f32 to vector<8x16xf32>
        %125 = arith.mulf %124, %123 : vector<8x16xf32>
        %126 = arith.addf %121, %125 : vector<8x16xf32>
        %c19 = arith.constant 19 : index
        %127 = memref.load %arg2[%c19] : memref<98xf32, #tpu.memory_space<smem>>
        %128 = vector.extract_strided_slice %101 {offsets = [0, 5], sizes = [8, 16], strides = [1, 1]} : vector<8x128xf32> to vector<8x16xf32>
        %129 = vector.broadcast %127 : f32 to vector<8x16xf32>
        %130 = arith.mulf %129, %128 : vector<8x16xf32>
        %131 = arith.addf %126, %130 : vector<8x16xf32>
        %c20 = arith.constant 20 : index
        %132 = memref.load %arg2[%c20] : memref<98xf32, #tpu.memory_space<smem>>
        %133 = vector.extract_strided_slice %101 {offsets = [0, 6], sizes = [8, 16], strides = [1, 1]} : vector<8x128xf32> to vector<8x16xf32>
        %134 = vector.broadcast %132 : f32 to vector<8x16xf32>
        %135 = arith.mulf %134, %133 : vector<8x16xf32>
        %136 = arith.addf %131, %135 : vector<8x16xf32>
        %c3_i32 = arith.constant 3 : i32
        %137 = arith.addi %18, %c3_i32 : i32
        %c0_25 = arith.constant 0 : index
        %138 = arith.index_cast %137 : i32 to index
        %c0_26 = arith.constant 0 : index
        %139 = vector.load %arg5[%c0_25, %138, %c0_26] : memref<2x22x128xf32, #tpu.memory_space<vmem>>, vector<1x8x128xf32>
        %140 = vector.shape_cast %139 : vector<1x8x128xf32> to vector<8x128xf32>
        %c21 = arith.constant 21 : index
        %141 = memref.load %arg2[%c21] : memref<98xf32, #tpu.memory_space<smem>>
        %142 = vector.extract_strided_slice %140 {offsets = [0, 0], sizes = [8, 16], strides = [1, 1]} : vector<8x128xf32> to vector<8x16xf32>
        %143 = vector.broadcast %141 : f32 to vector<8x16xf32>
        %144 = arith.mulf %143, %142 : vector<8x16xf32>
        %145 = arith.addf %136, %144 : vector<8x16xf32>
        %c22 = arith.constant 22 : index
        %146 = memref.load %arg2[%c22] : memref<98xf32, #tpu.memory_space<smem>>
        %147 = vector.extract_strided_slice %140 {offsets = [0, 1], sizes = [8, 16], strides = [1, 1]} : vector<8x128xf32> to vector<8x16xf32>
        %148 = vector.broadcast %146 : f32 to vector<8x16xf32>
        %149 = arith.mulf %148, %147 : vector<8x16xf32>
        %150 = arith.addf %145, %149 : vector<8x16xf32>
        %c23 = arith.constant 23 : index
        %151 = memref.load %arg2[%c23] : memref<98xf32, #tpu.memory_space<smem>>
        %152 = vector.extract_strided_slice %140 {offsets = [0, 2], sizes = [8, 16], strides = [1, 1]} : vector<8x128xf32> to vector<8x16xf32>
        %153 = vector.broadcast %151 : f32 to vector<8x16xf32>
        %154 = arith.mulf %153, %152 : vector<8x16xf32>
        %155 = arith.addf %150, %154 : vector<8x16xf32>
        %c24 = arith.constant 24 : index
        %156 = memref.load %arg2[%c24] : memref<98xf32, #tpu.memory_space<smem>>
        %157 = vector.extract_strided_slice %140 {offsets = [0, 3], sizes = [8, 16], strides = [1, 1]} : vector<8x128xf32> to vector<8x16xf32>
        %158 = vector.broadcast %156 : f32 to vector<8x16xf32>
        %159 = arith.mulf %158, %157 : vector<8x16xf32>
        %160 = arith.addf %155, %159 : vector<8x16xf32>
        %c25 = arith.constant 25 : index
        %161 = memref.load %arg2[%c25] : memref<98xf32, #tpu.memory_space<smem>>
        %162 = vector.extract_strided_slice %140 {offsets = [0, 4], sizes = [8, 16], strides = [1, 1]} : vector<8x128xf32> to vector<8x16xf32>
        %163 = vector.broadcast %161 : f32 to vector<8x16xf32>
        %164 = arith.mulf %163, %162 : vector<8x16xf32>
        %165 = arith.addf %160, %164 : vector<8x16xf32>
        %c26 = arith.constant 26 : index
        %166 = memref.load %arg2[%c26] : memref<98xf32, #tpu.memory_space<smem>>
        %167 = vector.extract_strided_slice %140 {offsets = [0, 5], sizes = [8, 16], strides = [1, 1]} : vector<8x128xf32> to vector<8x16xf32>
        %168 = vector.broadcast %166 : f32 to vector<8x16xf32>
        %169 = arith.mulf %168, %167 : vector<8x16xf32>
        %170 = arith.addf %165, %169 : vector<8x16xf32>
        %c27 = arith.constant 27 : index
        %171 = memref.load %arg2[%c27] : memref<98xf32, #tpu.memory_space<smem>>
        %172 = vector.extract_strided_slice %140 {offsets = [0, 6], sizes = [8, 16], strides = [1, 1]} : vector<8x128xf32> to vector<8x16xf32>
        %173 = vector.broadcast %171 : f32 to vector<8x16xf32>
        %174 = arith.mulf %173, %172 : vector<8x16xf32>
        %175 = arith.addf %170, %174 : vector<8x16xf32>
        %c4_i32 = arith.constant 4 : i32
        %176 = arith.addi %18, %c4_i32 : i32
        %c0_27 = arith.constant 0 : index
        %177 = arith.index_cast %176 : i32 to index
        %c0_28 = arith.constant 0 : index
        %178 = vector.load %arg5[%c0_27, %177, %c0_28] : memref<2x22x128xf32, #tpu.memory_space<vmem>>, vector<1x8x128xf32>
        %179 = vector.shape_cast %178 : vector<1x8x128xf32> to vector<8x128xf32>
        %c28 = arith.constant 28 : index
        %180 = memref.load %arg2[%c28] : memref<98xf32, #tpu.memory_space<smem>>
        %181 = vector.extract_strided_slice %179 {offsets = [0, 0], sizes = [8, 16], strides = [1, 1]} : vector<8x128xf32> to vector<8x16xf32>
        %182 = vector.broadcast %180 : f32 to vector<8x16xf32>
        %183 = arith.mulf %182, %181 : vector<8x16xf32>
        %184 = arith.addf %175, %183 : vector<8x16xf32>
        %c29 = arith.constant 29 : index
        %185 = memref.load %arg2[%c29] : memref<98xf32, #tpu.memory_space<smem>>
        %186 = vector.extract_strided_slice %179 {offsets = [0, 1], sizes = [8, 16], strides = [1, 1]} : vector<8x128xf32> to vector<8x16xf32>
        %187 = vector.broadcast %185 : f32 to vector<8x16xf32>
        %188 = arith.mulf %187, %186 : vector<8x16xf32>
        %189 = arith.addf %184, %188 : vector<8x16xf32>
        %c30 = arith.constant 30 : index
        %190 = memref.load %arg2[%c30] : memref<98xf32, #tpu.memory_space<smem>>
        %191 = vector.extract_strided_slice %179 {offsets = [0, 2], sizes = [8, 16], strides = [1, 1]} : vector<8x128xf32> to vector<8x16xf32>
        %192 = vector.broadcast %190 : f32 to vector<8x16xf32>
        %193 = arith.mulf %192, %191 : vector<8x16xf32>
        %194 = arith.addf %189, %193 : vector<8x16xf32>
        %c31 = arith.constant 31 : index
        %195 = memref.load %arg2[%c31] : memref<98xf32, #tpu.memory_space<smem>>
        %196 = vector.extract_strided_slice %179 {offsets = [0, 3], sizes = [8, 16], strides = [1, 1]} : vector<8x128xf32> to vector<8x16xf32>
        %197 = vector.broadcast %195 : f32 to vector<8x16xf32>
        %198 = arith.mulf %197, %196 : vector<8x16xf32>
        %199 = arith.addf %194, %198 : vector<8x16xf32>
        %c32 = arith.constant 32 : index
        %200 = memref.load %arg2[%c32] : memref<98xf32, #tpu.memory_space<smem>>
        %201 = vector.extract_strided_slice %179 {offsets = [0, 4], sizes = [8, 16], strides = [1, 1]} : vector<8x128xf32> to vector<8x16xf32>
        %202 = vector.broadcast %200 : f32 to vector<8x16xf32>
        %203 = arith.mulf %202, %201 : vector<8x16xf32>
        %204 = arith.addf %199, %203 : vector<8x16xf32>
        %c33 = arith.constant 33 : index
        %205 = memref.load %arg2[%c33] : memref<98xf32, #tpu.memory_space<smem>>
        %206 = vector.extract_strided_slice %179 {offsets = [0, 5], sizes = [8, 16], strides = [1, 1]} : vector<8x128xf32> to vector<8x16xf32>
        %207 = vector.broadcast %205 : f32 to vector<8x16xf32>
        %208 = arith.mulf %207, %206 : vector<8x16xf32>
        %209 = arith.addf %204, %208 : vector<8x16xf32>
        %c34 = arith.constant 34 : index
        %210 = memref.load %arg2[%c34] : memref<98xf32, #tpu.memory_space<smem>>
        %211 = vector.extract_strided_slice %179 {offsets = [0, 6], sizes = [8, 16], strides = [1, 1]} : vector<8x128xf32> to vector<8x16xf32>
        %212 = vector.broadcast %210 : f32 to vector<8x16xf32>
        %213 = arith.mulf %212, %211 : vector<8x16xf32>
        %214 = arith.addf %209, %213 : vector<8x16xf32>
        %c5_i32 = arith.constant 5 : i32
        %215 = arith.addi %18, %c5_i32 : i32
        %c0_29 = arith.constant 0 : index
        %216 = arith.index_cast %215 : i32 to index
        %c0_30 = arith.constant 0 : index
        %217 = vector.load %arg5[%c0_29, %216, %c0_30] : memref<2x22x128xf32, #tpu.memory_space<vmem>>, vector<1x8x128xf32>
        %218 = vector.shape_cast %217 : vector<1x8x128xf32> to vector<8x128xf32>
        %c35 = arith.constant 35 : index
        %219 = memref.load %arg2[%c35] : memref<98xf32, #tpu.memory_space<smem>>
        %220 = vector.extract_strided_slice %218 {offsets = [0, 0], sizes = [8, 16], strides = [1, 1]} : vector<8x128xf32> to vector<8x16xf32>
        %221 = vector.broadcast %219 : f32 to vector<8x16xf32>
        %222 = arith.mulf %221, %220 : vector<8x16xf32>
        %223 = arith.addf %214, %222 : vector<8x16xf32>
        %c36 = arith.constant 36 : index
        %224 = memref.load %arg2[%c36] : memref<98xf32, #tpu.memory_space<smem>>
        %225 = vector.extract_strided_slice %218 {offsets = [0, 1], sizes = [8, 16], strides = [1, 1]} : vector<8x128xf32> to vector<8x16xf32>
        %226 = vector.broadcast %224 : f32 to vector<8x16xf32>
        %227 = arith.mulf %226, %225 : vector<8x16xf32>
        %228 = arith.addf %223, %227 : vector<8x16xf32>
        %c37 = arith.constant 37 : index
        %229 = memref.load %arg2[%c37] : memref<98xf32, #tpu.memory_space<smem>>
        %230 = vector.extract_strided_slice %218 {offsets = [0, 2], sizes = [8, 16], strides = [1, 1]} : vector<8x128xf32> to vector<8x16xf32>
        %231 = vector.broadcast %229 : f32 to vector<8x16xf32>
        %232 = arith.mulf %231, %230 : vector<8x16xf32>
        %233 = arith.addf %228, %232 : vector<8x16xf32>
        %c38 = arith.constant 38 : index
        %234 = memref.load %arg2[%c38] : memref<98xf32, #tpu.memory_space<smem>>
        %235 = vector.extract_strided_slice %218 {offsets = [0, 3], sizes = [8, 16], strides = [1, 1]} : vector<8x128xf32> to vector<8x16xf32>
        %236 = vector.broadcast %234 : f32 to vector<8x16xf32>
        %237 = arith.mulf %236, %235 : vector<8x16xf32>
        %238 = arith.addf %233, %237 : vector<8x16xf32>
        %c39 = arith.constant 39 : index
        %239 = memref.load %arg2[%c39] : memref<98xf32, #tpu.memory_space<smem>>
        %240 = vector.extract_strided_slice %218 {offsets = [0, 4], sizes = [8, 16], strides = [1, 1]} : vector<8x128xf32> to vector<8x16xf32>
        %241 = vector.broadcast %239 : f32 to vector<8x16xf32>
        %242 = arith.mulf %241, %240 : vector<8x16xf32>
        %243 = arith.addf %238, %242 : vector<8x16xf32>
        %c40 = arith.constant 40 : index
        %244 = memref.load %arg2[%c40] : memref<98xf32, #tpu.memory_space<smem>>
        %245 = vector.extract_strided_slice %218 {offsets = [0, 5], sizes = [8, 16], strides = [1, 1]} : vector<8x128xf32> to vector<8x16xf32>
        %246 = vector.broadcast %244 : f32 to vector<8x16xf32>
        %247 = arith.mulf %246, %245 : vector<8x16xf32>
        %248 = arith.addf %243, %247 : vector<8x16xf32>
        %c41 = arith.constant 41 : index
        %249 = memref.load %arg2[%c41] : memref<98xf32, #tpu.memory_space<smem>>
        %250 = vector.extract_strided_slice %218 {offsets = [0, 6], sizes = [8, 16], strides = [1, 1]} : vector<8x128xf32> to vector<8x16xf32>
        %251 = vector.broadcast %249 : f32 to vector<8x16xf32>
        %252 = arith.mulf %251, %250 : vector<8x16xf32>
        %253 = arith.addf %248, %252 : vector<8x16xf32>
        %c6_i32 = arith.constant 6 : i32
        %254 = arith.addi %18, %c6_i32 : i32
        %c0_31 = arith.constant 0 : index
        %255 = arith.index_cast %254 : i32 to index
        %c0_32 = arith.constant 0 : index
        %256 = vector.load %arg5[%c0_31, %255, %c0_32] : memref<2x22x128xf32, #tpu.memory_space<vmem>>, vector<1x8x128xf32>
        %257 = vector.shape_cast %256 : vector<1x8x128xf32> to vector<8x128xf32>
        %c42 = arith.constant 42 : index
        %258 = memref.load %arg2[%c42] : memref<98xf32, #tpu.memory_space<smem>>
        %259 = vector.extract_strided_slice %257 {offsets = [0, 0], sizes = [8, 16], strides = [1, 1]} : vector<8x128xf32> to vector<8x16xf32>
        %260 = vector.broadcast %258 : f32 to vector<8x16xf32>
        %261 = arith.mulf %260, %259 : vector<8x16xf32>
        %262 = arith.addf %253, %261 : vector<8x16xf32>
        %c43 = arith.constant 43 : index
        %263 = memref.load %arg2[%c43] : memref<98xf32, #tpu.memory_space<smem>>
        %264 = vector.extract_strided_slice %257 {offsets = [0, 1], sizes = [8, 16], strides = [1, 1]} : vector<8x128xf32> to vector<8x16xf32>
        %265 = vector.broadcast %263 : f32 to vector<8x16xf32>
        %266 = arith.mulf %265, %264 : vector<8x16xf32>
        %267 = arith.addf %262, %266 : vector<8x16xf32>
        %c44 = arith.constant 44 : index
        %268 = memref.load %arg2[%c44] : memref<98xf32, #tpu.memory_space<smem>>
        %269 = vector.extract_strided_slice %257 {offsets = [0, 2], sizes = [8, 16], strides = [1, 1]} : vector<8x128xf32> to vector<8x16xf32>
        %270 = vector.broadcast %268 : f32 to vector<8x16xf32>
        %271 = arith.mulf %270, %269 : vector<8x16xf32>
        %272 = arith.addf %267, %271 : vector<8x16xf32>
        %c45 = arith.constant 45 : index
        %273 = memref.load %arg2[%c45] : memref<98xf32, #tpu.memory_space<smem>>
        %274 = vector.extract_strided_slice %257 {offsets = [0, 3], sizes = [8, 16], strides = [1, 1]} : vector<8x128xf32> to vector<8x16xf32>
        %275 = vector.broadcast %273 : f32 to vector<8x16xf32>
        %276 = arith.mulf %275, %274 : vector<8x16xf32>
        %277 = arith.addf %272, %276 : vector<8x16xf32>
        %c46 = arith.constant 46 : index
        %278 = memref.load %arg2[%c46] : memref<98xf32, #tpu.memory_space<smem>>
        %279 = vector.extract_strided_slice %257 {offsets = [0, 4], sizes = [8, 16], strides = [1, 1]} : vector<8x128xf32> to vector<8x16xf32>
        %280 = vector.broadcast %278 : f32 to vector<8x16xf32>
        %281 = arith.mulf %280, %279 : vector<8x16xf32>
        %282 = arith.addf %277, %281 : vector<8x16xf32>
        %c47 = arith.constant 47 : index
        %283 = memref.load %arg2[%c47] : memref<98xf32, #tpu.memory_space<smem>>
        %284 = vector.extract_strided_slice %257 {offsets = [0, 5], sizes = [8, 16], strides = [1, 1]} : vector<8x128xf32> to vector<8x16xf32>
        %285 = vector.broadcast %283 : f32 to vector<8x16xf32>
        %286 = arith.mulf %285, %284 : vector<8x16xf32>
        %287 = arith.addf %282, %286 : vector<8x16xf32>
        %c48 = arith.constant 48 : index
        %288 = memref.load %arg2[%c48] : memref<98xf32, #tpu.memory_space<smem>>
        %289 = vector.extract_strided_slice %257 {offsets = [0, 6], sizes = [8, 16], strides = [1, 1]} : vector<8x128xf32> to vector<8x16xf32>
        %290 = vector.broadcast %288 : f32 to vector<8x16xf32>
        %291 = arith.mulf %290, %289 : vector<8x16xf32>
        %292 = arith.addf %287, %291 : vector<8x16xf32>
        %c0_i32_33 = arith.constant 0 : i32
        %293 = arith.addi %18, %c0_i32_33 : i32
        %c1_34 = arith.constant 1 : index
        %294 = arith.index_cast %293 : i32 to index
        %c0_35 = arith.constant 0 : index
        %295 = vector.load %arg5[%c1_34, %294, %c0_35] : memref<2x22x128xf32, #tpu.memory_space<vmem>>, vector<1x8x128xf32>
        %296 = vector.shape_cast %295 : vector<1x8x128xf32> to vector<8x128xf32>
        %c49 = arith.constant 49 : index
        %297 = memref.load %arg2[%c49] : memref<98xf32, #tpu.memory_space<smem>>
        %298 = vector.extract_strided_slice %296 {offsets = [0, 0], sizes = [8, 16], strides = [1, 1]} : vector<8x128xf32> to vector<8x16xf32>
        %299 = vector.broadcast %297 : f32 to vector<8x16xf32>
        %300 = arith.mulf %299, %298 : vector<8x16xf32>
        %301 = arith.addf %292, %300 : vector<8x16xf32>
        %c50 = arith.constant 50 : index
        %302 = memref.load %arg2[%c50] : memref<98xf32, #tpu.memory_space<smem>>
        %303 = vector.extract_strided_slice %296 {offsets = [0, 1], sizes = [8, 16], strides = [1, 1]} : vector<8x128xf32> to vector<8x16xf32>
        %304 = vector.broadcast %302 : f32 to vector<8x16xf32>
        %305 = arith.mulf %304, %303 : vector<8x16xf32>
        %306 = arith.addf %301, %305 : vector<8x16xf32>
        %c51 = arith.constant 51 : index
        %307 = memref.load %arg2[%c51] : memref<98xf32, #tpu.memory_space<smem>>
        %308 = vector.extract_strided_slice %296 {offsets = [0, 2], sizes = [8, 16], strides = [1, 1]} : vector<8x128xf32> to vector<8x16xf32>
        %309 = vector.broadcast %307 : f32 to vector<8x16xf32>
        %310 = arith.mulf %309, %308 : vector<8x16xf32>
        %311 = arith.addf %306, %310 : vector<8x16xf32>
        %c52 = arith.constant 52 : index
        %312 = memref.load %arg2[%c52] : memref<98xf32, #tpu.memory_space<smem>>
        %313 = vector.extract_strided_slice %296 {offsets = [0, 3], sizes = [8, 16], strides = [1, 1]} : vector<8x128xf32> to vector<8x16xf32>
        %314 = vector.broadcast %312 : f32 to vector<8x16xf32>
        %315 = arith.mulf %314, %313 : vector<8x16xf32>
        %316 = arith.addf %311, %315 : vector<8x16xf32>
        %c53 = arith.constant 53 : index
        %317 = memref.load %arg2[%c53] : memref<98xf32, #tpu.memory_space<smem>>
        %318 = vector.extract_strided_slice %296 {offsets = [0, 4], sizes = [8, 16], strides = [1, 1]} : vector<8x128xf32> to vector<8x16xf32>
        %319 = vector.broadcast %317 : f32 to vector<8x16xf32>
        %320 = arith.mulf %319, %318 : vector<8x16xf32>
        %321 = arith.addf %316, %320 : vector<8x16xf32>
        %c54 = arith.constant 54 : index
        %322 = memref.load %arg2[%c54] : memref<98xf32, #tpu.memory_space<smem>>
        %323 = vector.extract_strided_slice %296 {offsets = [0, 5], sizes = [8, 16], strides = [1, 1]} : vector<8x128xf32> to vector<8x16xf32>
        %324 = vector.broadcast %322 : f32 to vector<8x16xf32>
        %325 = arith.mulf %324, %323 : vector<8x16xf32>
        %326 = arith.addf %321, %325 : vector<8x16xf32>
        %c55 = arith.constant 55 : index
        %327 = memref.load %arg2[%c55] : memref<98xf32, #tpu.memory_space<smem>>
        %328 = vector.extract_strided_slice %296 {offsets = [0, 6], sizes = [8, 16], strides = [1, 1]} : vector<8x128xf32> to vector<8x16xf32>
        %329 = vector.broadcast %327 : f32 to vector<8x16xf32>
        %330 = arith.mulf %329, %328 : vector<8x16xf32>
        %331 = arith.addf %326, %330 : vector<8x16xf32>
        %c1_i32_36 = arith.constant 1 : i32
        %332 = arith.addi %18, %c1_i32_36 : i32
        %c1_37 = arith.constant 1 : index
        %333 = arith.index_cast %332 : i32 to index
        %c0_38 = arith.constant 0 : index
        %334 = vector.load %arg5[%c1_37, %333, %c0_38] : memref<2x22x128xf32, #tpu.memory_space<vmem>>, vector<1x8x128xf32>
        %335 = vector.shape_cast %334 : vector<1x8x128xf32> to vector<8x128xf32>
        %c56 = arith.constant 56 : index
        %336 = memref.load %arg2[%c56] : memref<98xf32, #tpu.memory_space<smem>>
        %337 = vector.extract_strided_slice %335 {offsets = [0, 0], sizes = [8, 16], strides = [1, 1]} : vector<8x128xf32> to vector<8x16xf32>
        %338 = vector.broadcast %336 : f32 to vector<8x16xf32>
        %339 = arith.mulf %338, %337 : vector<8x16xf32>
        %340 = arith.addf %331, %339 : vector<8x16xf32>
        %c57 = arith.constant 57 : index
        %341 = memref.load %arg2[%c57] : memref<98xf32, #tpu.memory_space<smem>>
        %342 = vector.extract_strided_slice %335 {offsets = [0, 1], sizes = [8, 16], strides = [1, 1]} : vector<8x128xf32> to vector<8x16xf32>
        %343 = vector.broadcast %341 : f32 to vector<8x16xf32>
        %344 = arith.mulf %343, %342 : vector<8x16xf32>
        %345 = arith.addf %340, %344 : vector<8x16xf32>
        %c58 = arith.constant 58 : index
        %346 = memref.load %arg2[%c58] : memref<98xf32, #tpu.memory_space<smem>>
        %347 = vector.extract_strided_slice %335 {offsets = [0, 2], sizes = [8, 16], strides = [1, 1]} : vector<8x128xf32> to vector<8x16xf32>
        %348 = vector.broadcast %346 : f32 to vector<8x16xf32>
        %349 = arith.mulf %348, %347 : vector<8x16xf32>
        %350 = arith.addf %345, %349 : vector<8x16xf32>
        %c59 = arith.constant 59 : index
        %351 = memref.load %arg2[%c59] : memref<98xf32, #tpu.memory_space<smem>>
        %352 = vector.extract_strided_slice %335 {offsets = [0, 3], sizes = [8, 16], strides = [1, 1]} : vector<8x128xf32> to vector<8x16xf32>
        %353 = vector.broadcast %351 : f32 to vector<8x16xf32>
        %354 = arith.mulf %353, %352 : vector<8x16xf32>
        %355 = arith.addf %350, %354 : vector<8x16xf32>
        %c60 = arith.constant 60 : index
        %356 = memref.load %arg2[%c60] : memref<98xf32, #tpu.memory_space<smem>>
        %357 = vector.extract_strided_slice %335 {offsets = [0, 4], sizes = [8, 16], strides = [1, 1]} : vector<8x128xf32> to vector<8x16xf32>
        %358 = vector.broadcast %356 : f32 to vector<8x16xf32>
        %359 = arith.mulf %358, %357 : vector<8x16xf32>
        %360 = arith.addf %355, %359 : vector<8x16xf32>
        %c61 = arith.constant 61 : index
        %361 = memref.load %arg2[%c61] : memref<98xf32, #tpu.memory_space<smem>>
        %362 = vector.extract_strided_slice %335 {offsets = [0, 5], sizes = [8, 16], strides = [1, 1]} : vector<8x128xf32> to vector<8x16xf32>
        %363 = vector.broadcast %361 : f32 to vector<8x16xf32>
        %364 = arith.mulf %363, %362 : vector<8x16xf32>
        %365 = arith.addf %360, %364 : vector<8x16xf32>
        %c62 = arith.constant 62 : index
        %366 = memref.load %arg2[%c62] : memref<98xf32, #tpu.memory_space<smem>>
        %367 = vector.extract_strided_slice %335 {offsets = [0, 6], sizes = [8, 16], strides = [1, 1]} : vector<8x128xf32> to vector<8x16xf32>
        %368 = vector.broadcast %366 : f32 to vector<8x16xf32>
        %369 = arith.mulf %368, %367 : vector<8x16xf32>
        %370 = arith.addf %365, %369 : vector<8x16xf32>
        %c2_i32_39 = arith.constant 2 : i32
        %371 = arith.addi %18, %c2_i32_39 : i32
        %c1_40 = arith.constant 1 : index
        %372 = arith.index_cast %371 : i32 to index
        %c0_41 = arith.constant 0 : index
        %373 = vector.load %arg5[%c1_40, %372, %c0_41] : memref<2x22x128xf32, #tpu.memory_space<vmem>>, vector<1x8x128xf32>
        %374 = vector.shape_cast %373 : vector<1x8x128xf32> to vector<8x128xf32>
        %c63 = arith.constant 63 : index
        %375 = memref.load %arg2[%c63] : memref<98xf32, #tpu.memory_space<smem>>
        %376 = vector.extract_strided_slice %374 {offsets = [0, 0], sizes = [8, 16], strides = [1, 1]} : vector<8x128xf32> to vector<8x16xf32>
        %377 = vector.broadcast %375 : f32 to vector<8x16xf32>
        %378 = arith.mulf %377, %376 : vector<8x16xf32>
        %379 = arith.addf %370, %378 : vector<8x16xf32>
        %c64 = arith.constant 64 : index
        %380 = memref.load %arg2[%c64] : memref<98xf32, #tpu.memory_space<smem>>
        %381 = vector.extract_strided_slice %374 {offsets = [0, 1], sizes = [8, 16], strides = [1, 1]} : vector<8x128xf32> to vector<8x16xf32>
        %382 = vector.broadcast %380 : f32 to vector<8x16xf32>
        %383 = arith.mulf %382, %381 : vector<8x16xf32>
        %384 = arith.addf %379, %383 : vector<8x16xf32>
        %c65 = arith.constant 65 : index
        %385 = memref.load %arg2[%c65] : memref<98xf32, #tpu.memory_space<smem>>
        %386 = vector.extract_strided_slice %374 {offsets = [0, 2], sizes = [8, 16], strides = [1, 1]} : vector<8x128xf32> to vector<8x16xf32>
        %387 = vector.broadcast %385 : f32 to vector<8x16xf32>
        %388 = arith.mulf %387, %386 : vector<8x16xf32>
        %389 = arith.addf %384, %388 : vector<8x16xf32>
        %c66 = arith.constant 66 : index
        %390 = memref.load %arg2[%c66] : memref<98xf32, #tpu.memory_space<smem>>
        %391 = vector.extract_strided_slice %374 {offsets = [0, 3], sizes = [8, 16], strides = [1, 1]} : vector<8x128xf32> to vector<8x16xf32>
        %392 = vector.broadcast %390 : f32 to vector<8x16xf32>
        %393 = arith.mulf %392, %391 : vector<8x16xf32>
        %394 = arith.addf %389, %393 : vector<8x16xf32>
        %c67 = arith.constant 67 : index
        %395 = memref.load %arg2[%c67] : memref<98xf32, #tpu.memory_space<smem>>
        %396 = vector.extract_strided_slice %374 {offsets = [0, 4], sizes = [8, 16], strides = [1, 1]} : vector<8x128xf32> to vector<8x16xf32>
        %397 = vector.broadcast %395 : f32 to vector<8x16xf32>
        %398 = arith.mulf %397, %396 : vector<8x16xf32>
        %399 = arith.addf %394, %398 : vector<8x16xf32>
        %c68 = arith.constant 68 : index
        %400 = memref.load %arg2[%c68] : memref<98xf32, #tpu.memory_space<smem>>
        %401 = vector.extract_strided_slice %374 {offsets = [0, 5], sizes = [8, 16], strides = [1, 1]} : vector<8x128xf32> to vector<8x16xf32>
        %402 = vector.broadcast %400 : f32 to vector<8x16xf32>
        %403 = arith.mulf %402, %401 : vector<8x16xf32>
        %404 = arith.addf %399, %403 : vector<8x16xf32>
        %c69 = arith.constant 69 : index
        %405 = memref.load %arg2[%c69] : memref<98xf32, #tpu.memory_space<smem>>
        %406 = vector.extract_strided_slice %374 {offsets = [0, 6], sizes = [8, 16], strides = [1, 1]} : vector<8x128xf32> to vector<8x16xf32>
        %407 = vector.broadcast %405 : f32 to vector<8x16xf32>
        %408 = arith.mulf %407, %406 : vector<8x16xf32>
        %409 = arith.addf %404, %408 : vector<8x16xf32>
        %c3_i32_42 = arith.constant 3 : i32
        %410 = arith.addi %18, %c3_i32_42 : i32
        %c1_43 = arith.constant 1 : index
        %411 = arith.index_cast %410 : i32 to index
        %c0_44 = arith.constant 0 : index
        %412 = vector.load %arg5[%c1_43, %411, %c0_44] : memref<2x22x128xf32, #tpu.memory_space<vmem>>, vector<1x8x128xf32>
        %413 = vector.shape_cast %412 : vector<1x8x128xf32> to vector<8x128xf32>
        %c70 = arith.constant 70 : index
        %414 = memref.load %arg2[%c70] : memref<98xf32, #tpu.memory_space<smem>>
        %415 = vector.extract_strided_slice %413 {offsets = [0, 0], sizes = [8, 16], strides = [1, 1]} : vector<8x128xf32> to vector<8x16xf32>
        %416 = vector.broadcast %414 : f32 to vector<8x16xf32>
        %417 = arith.mulf %416, %415 : vector<8x16xf32>
        %418 = arith.addf %409, %417 : vector<8x16xf32>
        %c71 = arith.constant 71 : index
        %419 = memref.load %arg2[%c71] : memref<98xf32, #tpu.memory_space<smem>>
        %420 = vector.extract_strided_slice %413 {offsets = [0, 1], sizes = [8, 16], strides = [1, 1]} : vector<8x128xf32> to vector<8x16xf32>
        %421 = vector.broadcast %419 : f32 to vector<8x16xf32>
        %422 = arith.mulf %421, %420 : vector<8x16xf32>
        %423 = arith.addf %418, %422 : vector<8x16xf32>
        %c72 = arith.constant 72 : index
        %424 = memref.load %arg2[%c72] : memref<98xf32, #tpu.memory_space<smem>>
        %425 = vector.extract_strided_slice %413 {offsets = [0, 2], sizes = [8, 16], strides = [1, 1]} : vector<8x128xf32> to vector<8x16xf32>
        %426 = vector.broadcast %424 : f32 to vector<8x16xf32>
        %427 = arith.mulf %426, %425 : vector<8x16xf32>
        %428 = arith.addf %423, %427 : vector<8x16xf32>
        %c73 = arith.constant 73 : index
        %429 = memref.load %arg2[%c73] : memref<98xf32, #tpu.memory_space<smem>>
        %430 = vector.extract_strided_slice %413 {offsets = [0, 3], sizes = [8, 16], strides = [1, 1]} : vector<8x128xf32> to vector<8x16xf32>
        %431 = vector.broadcast %429 : f32 to vector<8x16xf32>
        %432 = arith.mulf %431, %430 : vector<8x16xf32>
        %433 = arith.addf %428, %432 : vector<8x16xf32>
        %c74 = arith.constant 74 : index
        %434 = memref.load %arg2[%c74] : memref<98xf32, #tpu.memory_space<smem>>
        %435 = vector.extract_strided_slice %413 {offsets = [0, 4], sizes = [8, 16], strides = [1, 1]} : vector<8x128xf32> to vector<8x16xf32>
        %436 = vector.broadcast %434 : f32 to vector<8x16xf32>
        %437 = arith.mulf %436, %435 : vector<8x16xf32>
        %438 = arith.addf %433, %437 : vector<8x16xf32>
        %c75 = arith.constant 75 : index
        %439 = memref.load %arg2[%c75] : memref<98xf32, #tpu.memory_space<smem>>
        %440 = vector.extract_strided_slice %413 {offsets = [0, 5], sizes = [8, 16], strides = [1, 1]} : vector<8x128xf32> to vector<8x16xf32>
        %441 = vector.broadcast %439 : f32 to vector<8x16xf32>
        %442 = arith.mulf %441, %440 : vector<8x16xf32>
        %443 = arith.addf %438, %442 : vector<8x16xf32>
        %c76 = arith.constant 76 : index
        %444 = memref.load %arg2[%c76] : memref<98xf32, #tpu.memory_space<smem>>
        %445 = vector.extract_strided_slice %413 {offsets = [0, 6], sizes = [8, 16], strides = [1, 1]} : vector<8x128xf32> to vector<8x16xf32>
        %446 = vector.broadcast %444 : f32 to vector<8x16xf32>
        %447 = arith.mulf %446, %445 : vector<8x16xf32>
        %448 = arith.addf %443, %447 : vector<8x16xf32>
        %c4_i32_45 = arith.constant 4 : i32
        %449 = arith.addi %18, %c4_i32_45 : i32
        %c1_46 = arith.constant 1 : index
        %450 = arith.index_cast %449 : i32 to index
        %c0_47 = arith.constant 0 : index
        %451 = vector.load %arg5[%c1_46, %450, %c0_47] : memref<2x22x128xf32, #tpu.memory_space<vmem>>, vector<1x8x128xf32>
        %452 = vector.shape_cast %451 : vector<1x8x128xf32> to vector<8x128xf32>
        %c77 = arith.constant 77 : index
        %453 = memref.load %arg2[%c77] : memref<98xf32, #tpu.memory_space<smem>>
        %454 = vector.extract_strided_slice %452 {offsets = [0, 0], sizes = [8, 16], strides = [1, 1]} : vector<8x128xf32> to vector<8x16xf32>
        %455 = vector.broadcast %453 : f32 to vector<8x16xf32>
        %456 = arith.mulf %455, %454 : vector<8x16xf32>
        %457 = arith.addf %448, %456 : vector<8x16xf32>
        %c78 = arith.constant 78 : index
        %458 = memref.load %arg2[%c78] : memref<98xf32, #tpu.memory_space<smem>>
        %459 = vector.extract_strided_slice %452 {offsets = [0, 1], sizes = [8, 16], strides = [1, 1]} : vector<8x128xf32> to vector<8x16xf32>
        %460 = vector.broadcast %458 : f32 to vector<8x16xf32>
        %461 = arith.mulf %460, %459 : vector<8x16xf32>
        %462 = arith.addf %457, %461 : vector<8x16xf32>
        %c79 = arith.constant 79 : index
        %463 = memref.load %arg2[%c79] : memref<98xf32, #tpu.memory_space<smem>>
        %464 = vector.extract_strided_slice %452 {offsets = [0, 2], sizes = [8, 16], strides = [1, 1]} : vector<8x128xf32> to vector<8x16xf32>
        %465 = vector.broadcast %463 : f32 to vector<8x16xf32>
        %466 = arith.mulf %465, %464 : vector<8x16xf32>
        %467 = arith.addf %462, %466 : vector<8x16xf32>
        %c80 = arith.constant 80 : index
        %468 = memref.load %arg2[%c80] : memref<98xf32, #tpu.memory_space<smem>>
        %469 = vector.extract_strided_slice %452 {offsets = [0, 3], sizes = [8, 16], strides = [1, 1]} : vector<8x128xf32> to vector<8x16xf32>
        %470 = vector.broadcast %468 : f32 to vector<8x16xf32>
        %471 = arith.mulf %470, %469 : vector<8x16xf32>
        %472 = arith.addf %467, %471 : vector<8x16xf32>
        %c81 = arith.constant 81 : index
        %473 = memref.load %arg2[%c81] : memref<98xf32, #tpu.memory_space<smem>>
        %474 = vector.extract_strided_slice %452 {offsets = [0, 4], sizes = [8, 16], strides = [1, 1]} : vector<8x128xf32> to vector<8x16xf32>
        %475 = vector.broadcast %473 : f32 to vector<8x16xf32>
        %476 = arith.mulf %475, %474 : vector<8x16xf32>
        %477 = arith.addf %472, %476 : vector<8x16xf32>
        %c82 = arith.constant 82 : index
        %478 = memref.load %arg2[%c82] : memref<98xf32, #tpu.memory_space<smem>>
        %479 = vector.extract_strided_slice %452 {offsets = [0, 5], sizes = [8, 16], strides = [1, 1]} : vector<8x128xf32> to vector<8x16xf32>
        %480 = vector.broadcast %478 : f32 to vector<8x16xf32>
        %481 = arith.mulf %480, %479 : vector<8x16xf32>
        %482 = arith.addf %477, %481 : vector<8x16xf32>
        %c83 = arith.constant 83 : index
        %483 = memref.load %arg2[%c83] : memref<98xf32, #tpu.memory_space<smem>>
        %484 = vector.extract_strided_slice %452 {offsets = [0, 6], sizes = [8, 16], strides = [1, 1]} : vector<8x128xf32> to vector<8x16xf32>
        %485 = vector.broadcast %483 : f32 to vector<8x16xf32>
        %486 = arith.mulf %485, %484 : vector<8x16xf32>
        %487 = arith.addf %482, %486 : vector<8x16xf32>
        %c5_i32_48 = arith.constant 5 : i32
        %488 = arith.addi %18, %c5_i32_48 : i32
        %c1_49 = arith.constant 1 : index
        %489 = arith.index_cast %488 : i32 to index
        %c0_50 = arith.constant 0 : index
        %490 = vector.load %arg5[%c1_49, %489, %c0_50] : memref<2x22x128xf32, #tpu.memory_space<vmem>>, vector<1x8x128xf32>
        %491 = vector.shape_cast %490 : vector<1x8x128xf32> to vector<8x128xf32>
        %c84 = arith.constant 84 : index
        %492 = memref.load %arg2[%c84] : memref<98xf32, #tpu.memory_space<smem>>
        %493 = vector.extract_strided_slice %491 {offsets = [0, 0], sizes = [8, 16], strides = [1, 1]} : vector<8x128xf32> to vector<8x16xf32>
        %494 = vector.broadcast %492 : f32 to vector<8x16xf32>
        %495 = arith.mulf %494, %493 : vector<8x16xf32>
        %496 = arith.addf %487, %495 : vector<8x16xf32>
        %c85 = arith.constant 85 : index
        %497 = memref.load %arg2[%c85] : memref<98xf32, #tpu.memory_space<smem>>
        %498 = vector.extract_strided_slice %491 {offsets = [0, 1], sizes = [8, 16], strides = [1, 1]} : vector<8x128xf32> to vector<8x16xf32>
        %499 = vector.broadcast %497 : f32 to vector<8x16xf32>
        %500 = arith.mulf %499, %498 : vector<8x16xf32>
        %501 = arith.addf %496, %500 : vector<8x16xf32>
        %c86 = arith.constant 86 : index
        %502 = memref.load %arg2[%c86] : memref<98xf32, #tpu.memory_space<smem>>
        %503 = vector.extract_strided_slice %491 {offsets = [0, 2], sizes = [8, 16], strides = [1, 1]} : vector<8x128xf32> to vector<8x16xf32>
        %504 = vector.broadcast %502 : f32 to vector<8x16xf32>
        %505 = arith.mulf %504, %503 : vector<8x16xf32>
        %506 = arith.addf %501, %505 : vector<8x16xf32>
        %c87 = arith.constant 87 : index
        %507 = memref.load %arg2[%c87] : memref<98xf32, #tpu.memory_space<smem>>
        %508 = vector.extract_strided_slice %491 {offsets = [0, 3], sizes = [8, 16], strides = [1, 1]} : vector<8x128xf32> to vector<8x16xf32>
        %509 = vector.broadcast %507 : f32 to vector<8x16xf32>
        %510 = arith.mulf %509, %508 : vector<8x16xf32>
        %511 = arith.addf %506, %510 : vector<8x16xf32>
        %c88 = arith.constant 88 : index
        %512 = memref.load %arg2[%c88] : memref<98xf32, #tpu.memory_space<smem>>
        %513 = vector.extract_strided_slice %491 {offsets = [0, 4], sizes = [8, 16], strides = [1, 1]} : vector<8x128xf32> to vector<8x16xf32>
        %514 = vector.broadcast %512 : f32 to vector<8x16xf32>
        %515 = arith.mulf %514, %513 : vector<8x16xf32>
        %516 = arith.addf %511, %515 : vector<8x16xf32>
        %c89 = arith.constant 89 : index
        %517 = memref.load %arg2[%c89] : memref<98xf32, #tpu.memory_space<smem>>
        %518 = vector.extract_strided_slice %491 {offsets = [0, 5], sizes = [8, 16], strides = [1, 1]} : vector<8x128xf32> to vector<8x16xf32>
        %519 = vector.broadcast %517 : f32 to vector<8x16xf32>
        %520 = arith.mulf %519, %518 : vector<8x16xf32>
        %521 = arith.addf %516, %520 : vector<8x16xf32>
        %c90 = arith.constant 90 : index
        %522 = memref.load %arg2[%c90] : memref<98xf32, #tpu.memory_space<smem>>
        %523 = vector.extract_strided_slice %491 {offsets = [0, 6], sizes = [8, 16], strides = [1, 1]} : vector<8x128xf32> to vector<8x16xf32>
        %524 = vector.broadcast %522 : f32 to vector<8x16xf32>
        %525 = arith.mulf %524, %523 : vector<8x16xf32>
        %526 = arith.addf %521, %525 : vector<8x16xf32>
        %c6_i32_51 = arith.constant 6 : i32
        %527 = arith.addi %18, %c6_i32_51 : i32
        %c1_52 = arith.constant 1 : index
        %528 = arith.index_cast %527 : i32 to index
        %c0_53 = arith.constant 0 : index
        %529 = vector.load %arg5[%c1_52, %528, %c0_53] : memref<2x22x128xf32, #tpu.memory_space<vmem>>, vector<1x8x128xf32>
        %530 = vector.shape_cast %529 : vector<1x8x128xf32> to vector<8x128xf32>
        %c91 = arith.constant 91 : index
        %531 = memref.load %arg2[%c91] : memref<98xf32, #tpu.memory_space<smem>>
        %532 = vector.extract_strided_slice %530 {offsets = [0, 0], sizes = [8, 16], strides = [1, 1]} : vector<8x128xf32> to vector<8x16xf32>
        %533 = vector.broadcast %531 : f32 to vector<8x16xf32>
        %534 = arith.mulf %533, %532 : vector<8x16xf32>
        %535 = arith.addf %526, %534 : vector<8x16xf32>
        %c92 = arith.constant 92 : index
        %536 = memref.load %arg2[%c92] : memref<98xf32, #tpu.memory_space<smem>>
        %537 = vector.extract_strided_slice %530 {offsets = [0, 1], sizes = [8, 16], strides = [1, 1]} : vector<8x128xf32> to vector<8x16xf32>
        %538 = vector.broadcast %536 : f32 to vector<8x16xf32>
        %539 = arith.mulf %538, %537 : vector<8x16xf32>
        %540 = arith.addf %535, %539 : vector<8x16xf32>
        %c93 = arith.constant 93 : index
        %541 = memref.load %arg2[%c93] : memref<98xf32, #tpu.memory_space<smem>>
        %542 = vector.extract_strided_slice %530 {offsets = [0, 2], sizes = [8, 16], strides = [1, 1]} : vector<8x128xf32> to vector<8x16xf32>
        %543 = vector.broadcast %541 : f32 to vector<8x16xf32>
        %544 = arith.mulf %543, %542 : vector<8x16xf32>
        %545 = arith.addf %540, %544 : vector<8x16xf32>
        %c94 = arith.constant 94 : index
        %546 = memref.load %arg2[%c94] : memref<98xf32, #tpu.memory_space<smem>>
        %547 = vector.extract_strided_slice %530 {offsets = [0, 3], sizes = [8, 16], strides = [1, 1]} : vector<8x128xf32> to vector<8x16xf32>
        %548 = vector.broadcast %546 : f32 to vector<8x16xf32>
        %549 = arith.mulf %548, %547 : vector<8x16xf32>
        %550 = arith.addf %545, %549 : vector<8x16xf32>
        %c95 = arith.constant 95 : index
        %551 = memref.load %arg2[%c95] : memref<98xf32, #tpu.memory_space<smem>>
        %552 = vector.extract_strided_slice %530 {offsets = [0, 4], sizes = [8, 16], strides = [1, 1]} : vector<8x128xf32> to vector<8x16xf32>
        %553 = vector.broadcast %551 : f32 to vector<8x16xf32>
        %554 = arith.mulf %553, %552 : vector<8x16xf32>
        %555 = arith.addf %550, %554 : vector<8x16xf32>
        %c96 = arith.constant 96 : index
        %556 = memref.load %arg2[%c96] : memref<98xf32, #tpu.memory_space<smem>>
        %557 = vector.extract_strided_slice %530 {offsets = [0, 5], sizes = [8, 16], strides = [1, 1]} : vector<8x128xf32> to vector<8x16xf32>
        %558 = vector.broadcast %556 : f32 to vector<8x16xf32>
        %559 = arith.mulf %558, %557 : vector<8x16xf32>
        %560 = arith.addf %555, %559 : vector<8x16xf32>
        %c97 = arith.constant 97 : index
        %561 = memref.load %arg2[%c97] : memref<98xf32, #tpu.memory_space<smem>>
        %562 = vector.extract_strided_slice %530 {offsets = [0, 6], sizes = [8, 16], strides = [1, 1]} : vector<8x128xf32> to vector<8x16xf32>
        %563 = vector.broadcast %561 : f32 to vector<8x16xf32>
        %564 = arith.mulf %563, %562 : vector<8x16xf32>
        %565 = arith.addf %560, %564 : vector<8x16xf32>
        %566 = arith.negf %565 : vector<8x16xf32>
        %567 = math.exp %566 : vector<8x16xf32>
        %cst_54 = arith.constant 1.000000e+00 : f32
        %568 = vector.broadcast %cst_54 : f32 to vector<8x16xf32>
        %569 = arith.addf %568, %567 : vector<8x16xf32>
        %570 = arith.divf %568, %569 : vector<8x16xf32>
        %c0_55 = arith.constant 0 : index
        %571 = arith.index_cast %18 : i32 to index
        %c0_56 = arith.constant 0 : index
        %572 = vector.load %arg4[%c0_55, %571, %c0_56] : memref<1x16x16xf32, #tpu.memory_space<vmem>>, vector<1x8x16xf32>
        %573 = vector.shape_cast %572 : vector<1x8x16xf32> to vector<8x16xf32>
        %574 = vector.shape_cast %570 : vector<8x16xf32> to vector<1x8x16xf32>
        tpu.vector_store %arg4[%c0_55, %571, %c0_56], %574 {strides = array<i32>} : memref<1x16x16xf32, #tpu.memory_space<vmem>>, vector<1x8x16xf32>,
      }
      %c2_i32_10 = arith.constant 2 : i32
    } else {
    }
    return
  }
  func.func @transform_0(%arg0: i32, %arg1: i32) -> i32 {
    %c0_i32 = arith.constant 0 : i32
    %c0_i32_0 = arith.constant 0 : i32
    return %c0_i32 : i32
  }
  func.func @transform_1(%arg0: i32, %arg1: i32) -> (i32, i32, i32, i32) {
    %c0_i32 = arith.constant 0 : i32
    %c0_i32_0 = arith.constant 0 : i32
    %c0_i32_1 = arith.constant 0 : i32
    return %arg0, %arg1, %c0_i32, %c0_i32_0 : i32, i32, i32, i32
  }
  func.func @transform_2(%arg0: i32, %arg1: i32) -> (i32, i32, i32) {
    %c0_i32 = arith.constant 0 : i32
    %c0_i32_0 = arith.constant 0 : i32
    %c0_i32_1 = arith.constant 0 : i32
    return %arg0, %c0_i32, %c0_i32_0 : i32, i32, i32
  }
}

</mosaic_0001>

<llo_original>
// kernel: spatial_attention.1
$region0: #{spatial_attention.1}
  #allocation0 [shape = 'u32[]', space=smem, size = 0x4, offset = 0x4, fixed_abs, tag = 'smem constant byte address 0x4 - core index']
  #allocation1 [shape = 'u32[144,128]{1,0:T(1,128)}', space=vmem, size = 0x12000, scoped, tag = 'internal scratch']
  #allocation2 [shape = 'f32[2,22,128]{2,1,0:T(8,128)}', space=vmem, size = 0x6000, scoped, tag = 'scratch operand']
  %s0 = inlined_call_operand.vmem [shape: f32[98], index: 0, kind: input, shape index: {}]
  %s1 = inlined_call_operand.hbm [shape: bf16[2,4,16,16], index: 1, kind: input, shape index: {}]
  %s2 = inlined_call_operand.hbm [shape: f32[2,16,16], index: 2, kind: output, shape index: {}]
  %s3 = sld [smem:[#allocation0]]
  $region68: #{spatial_attention.1} parent=0
    _
  %s5 = ssub.s32 1, %s3
  %s6 = scalar_select 0, %s5, %s3
  $region1: #{spatial_attention.1} parent=0
    #allocation3 [shape = 'u8[512]{0}', space=smem, size = 0x200, scoped, tag = 'input window, operand 0, single buffered']
    #allocation4 [shape = 's32[2]{0}', space=sflag, size = 0x8, scoped, tag = 'scoped memory for spatial_attention.1']
    #allocation5 [shape = 's32[2]{0}', space=sflag, size = 0x8, scoped, tag = 'scoped memory for spatial_attention.1']
    #allocation6 [shape = 's32[2]{0}', space=sflag, size = 0x8, scoped, tag = 'scoped memory for spatial_attention.1']
    #allocation7 [shape = 'u8[16384]{0}', space=vmem, size = 0x4000, scoped, tag = 'input window, operand 1']
    #allocation8 [shape = 'u8[16384]{0}', space=vmem, size = 0x4000, scoped, tag = 'output window, operand 0']
    %7 = vsyncpa [#allocation6], 0
    %8 = vsyncpa [#allocation4], 0
    %s9 = scalar_lea.sflag [#allocation4], 1
    %10 = vsyncpa %s9, 0
    %11 = vsyncpa [#allocation5], 0
    %s12 = scalar_lea.sflag [#allocation5], 1
    %13 = vsyncpa %s12, 0
    loop: start=0, step=1, limit=6
    $region2: #{spatial_attention.1} parent=1 // loop_pre_header
      _
    $region3: #{spatial_attention.1} parent=1 // loop_header
      %s15 = sphi 0, %s19
      %p16 = scmp.ge.s32.totalorder %s15, 6
      %s22 = sphi 0, %s34
      %s23 = sphi 0, %s30
      %s24 = sphi 0, %s22
      %s25 = sphi 0, %s23
      %s26 = sphi 0, %s24
      %s27 = sphi 0, %s25
      %s35 = sphi 0, %s35
      %s37 = sphi 0, %s35
      %s38 = sphi 0, %s37
      %s52 = sphi 0, %s38
      %s60 = sphi 0, %s62
      %s63 = sphi 0, %s60
      %s64 = sphi 0, %s63
      %s80 = sphi 0, %s64
      %s86 = sphi 0, %s88
      %s89 = sphi 0, %s86
      %s90 = sphi 0, %s89
      %s106 = sphi 0, %s90
    $region4: #{spatial_attention.1} parent=1 // loop_header_branch
      %18 = sbr.rel (%p16) target = $region8
    $region5: #{spatial_attention.1} parent=1 // loop_body
      %s20 = ssub.s32 %s15, 1
      %s21 = ssub.s32 %s15, 2
      %s28 = sadd.s32 1, %s23
      %p29 = scmp.ge.s32.totalorder %s28, 2
      %s30 = scalar_select %p29, 0, %s28
      %s31 = sadd.s32 1, %s22
      %s32 = scalar_select %p29, %s31, %s22
      %p33 = scmp.ge.s32.totalorder %s32, 2
      %s34 = scalar_select %p33, 0, %s32
      %s36 = sadd.s32 %s35, 1
      %p39 = scmp.eq.s32.totalorder %s15, 3
      %p40 = scmp.ne.s32.totalorder %s35, %s37
      %p41 = scmp.eq.s32.totalorder %s15, 0
      %p42 = por %p40, %p41
      %p43 = scmp.ne.s32.totalorder %s35, %s37
      %p44 = scmp.eq.s32.totalorder %s20, 3
      %p45 = por %p43, %p44
      %p46 = scmp.ne.s32.totalorder %s37, %s38
      %p47 = scmp.eq.s32.totalorder %s20, 0
      %p48 = por %p46, %p47
      %p49 = scmp.ne.s32.totalorder %s37, %s38
      %p50 = scmp.eq.s32.totalorder %s21, 3
      %p51 = por %p49, %p50
      %p53 = scmp.ne.s32.totalorder %s38, %s52
      %p54 = scmp.eq.s32.totalorder %s21, 0
      %p55 = por %p53, %p54
      %s56 = ssub.s32 %s22, %s34
      %s57 = ssub.s32 %s23, %s30
      %s58 = sor.u32 %s56, %s57
      %p59 = scmp.eq.s32.totalorder %s58, 0
      %s61 = sadd.s32 %s60, 1
      %s62 = scalar_select %p59, %s60, %s61
      %p65 = pneg %p59
      %p66 = scmp.eq.s32.totalorder %s15, 3
      %p67 = por %p65, %p66
      %p68 = scmp.ne.s32.totalorder %s60, %s63
      %p69 = scmp.eq.s32.totalorder %s15, 0
      %p70 = por %p68, %p69
      %p71 = scmp.ne.s32.totalorder %s60, %s63
      %p72 = scmp.eq.s32.totalorder %s20, 3
      %p73 = por %p71, %p72
      %p74 = scmp.ne.s32.totalorder %s63, %s64
      %p75 = scmp.eq.s32.totalorder %s20, 0
      %p76 = por %p74, %p75
      %p77 = scmp.ne.s32.totalorder %s63, %s64
      %p78 = scmp.eq.s32.totalorder %s21, 3
      %p79 = por %p77, %p78
      %p81 = scmp.ne.s32.totalorder %s64, %s80
      %p82 = scmp.eq.s32.totalorder %s21, 0
      %p83 = por %p81, %p82
      %s84 = ssub.s32 %s22, %s34
      %p85 = scmp.eq.s32.totalorder %s84, 0
      %s87 = sadd.s32 %s86, 1
      %s88 = scalar_select %p85, %s86, %s87
      %p91 = pneg %p85
      %p92 = scmp.eq.s32.totalorder %s15, 3
      %p93 = por %p91, %p92
      %p94 = scmp.ne.s32.totalorder %s86, %s89
      %p95 = scmp.eq.s32.totalorder %s15, 0
      %p96 = por %p94, %p95
      %p97 = scmp.ne.s32.totalorder %s86, %s89
      %p98 = scmp.eq.s32.totalorder %s20, 3
      %p99 = por %p97, %p98
      %p100 = scmp.ne.s32.totalorder %s89, %s90
      %p101 = scmp.eq.s32.totalorder %s20, 0
      %p102 = por %p100, %p101
      %p103 = scmp.ne.s32.totalorder %s89, %s90
      %p104 = scmp.eq.s32.totalorder %s21, 3
      %p105 = por %p103, %p104
      %p107 = scmp.ne.s32.totalorder %s90, %s106
      %p108 = scmp.eq.s32.totalorder %s21, 0
      %p109 = por %p107, %p108
      %p110 = scmp.le.s32.totalorder 1, %s15
      %p111 = scmp.lt.s32.totalorder %s15, 5
      %p112 = pnand %p110, %p111
      %p113 = pneg %p112
      // Predicated region
      $region9: #{spatial_attention.1} parent=5 // pred_check
        _
      $region10: #{spatial_attention.1} parent=5 // pred_check_branch
        %115 = sbr.rel (%p112) target = $region12
      $region11: #{spatial_attention.1} parent=5 // pred_region
        %s116 = ssub.s32 %s15, 1
        // Predicated region
        $region13: #{spatial_attention.1} parent=11 // pred_check
          %p117 = pneg %p48
        $region14: #{spatial_attention.1} parent=11 // pred_check_branch
          %119 = sbr.rel (%p117) target = $region16
        $region15: #{spatial_attention.1} parent=11 // pred_region
          %s121 = ssub.s32 16, 16
          %122 = vsyncadd [#allocation6], %s121
          %s124 = sshll.u32 %s0, 4
          %s125 = int_to_ptr.vmem [resolvable:$true] %s124
          %127 = dma.vmem_to_smem %s125, 16, [#allocation3], [#allocation6]
        $region16: #{spatial_attention.1} parent=11 // pred_fallthru
          _
      $region12: #{spatial_attention.1} parent=5 // pred_fallthru
        _
      %p128 = scmp.lt.s32.totalorder %s15, 4
      // Predicated region
      $region17: #{spatial_attention.1} parent=5 // pred_check
        %p129 = pneg %p128
      $region18: #{spatial_attention.1} parent=5 // pred_check_branch
        %131 = sbr.rel (%p129) target = $region20
      $region19: #{spatial_attention.1} parent=5 // pred_region
        // Predicated region
        $region21: #{spatial_attention.1} parent=19 // pred_check
          %p132 = pneg %p70
        $region22: #{spatial_attention.1} parent=19 // pred_check_branch
          %134 = sbr.rel (%p132) target = $region24
        $region23: #{spatial_attention.1} parent=19 // pred_region
          %s135 = sand.u32 %s60, 1
          %s136 = scalar_lea.sflag [#allocation4], %s135
          %s137 = sand.u32 %s60, 1
          %s138 = smul.addr %s137, 16
          %s139 = scalar_lea.vmem [#allocation7], %s138
          %s140 = smul.u32 2, %s23
          %s142 = ssub.s32 256, 256
          %143 = vsyncadd %s136, %s142
          %s144 = smul.addr %s140, 2
          %s145 = smul.addr %s22, 8
          %s146 = sadd.s32 %s144, %s145
          %s147 = smul.addr %s146, 64
          %s148 = scalar_lea.hbm %s1, %s147
          %s149 = sshll.u32 %s139, 4
          %s150 = int_to_ptr.vmem [resolvable:$true] %s149
          %155 = dma.hbm_to_vmem [thread:$0]  %s148, 256, %s150, %s136, 64, 64, 4
        $region24: #{spatial_attention.1} parent=19 // pred_fallthru
          _
      $region20: #{spatial_attention.1} parent=5 // pred_fallthru
        _
      %p156 = scmp.le.s32.totalorder 1, %s15
      %p157 = scmp.lt.s32.totalorder %s15, 5
      %p158 = pnand %p156, %p157
      %p159 = pneg %p158
      // Predicated region
      $region25: #{spatial_attention.1} parent=5 // pred_check
        _
      $region26: #{spatial_attention.1} parent=5 // pred_check_branch
        %161 = sbr.rel (%p158) target = $region28
      $region27: #{spatial_attention.1} parent=5 // pred_region
        %s162 = ssub.s32 %s15, 1
        // Predicated region
        $region29: #{spatial_attention.1} parent=27 // pred_check
          %p163 = pneg %p48
        $region30: #{spatial_attention.1} parent=27 // pred_check_branch
          %165 = sbr.rel (%p163) target = $region32
        $region31: #{spatial_attention.1} parent=27 // pred_region
          %166 = dma.done [#allocation6], 16
        $region32: #{spatial_attention.1} parent=27 // pred_fallthru
          _
        %s167 = sand.u32 %s63, 1
        %s168 = scalar_lea.sflag [#allocation4], %s167
        %s169 = sand.u32 %s63, 1
        %s170 = smul.addr %s169, 16
        %s171 = scalar_lea.vmem [#allocation7], %s170
        // Predicated region
        $region33: #{spatial_attention.1} parent=27 // pred_check
          %p172 = pneg %p76
        $region34: #{spatial_attention.1} parent=27 // pred_check_branch
          %174 = sbr.rel (%p172) target = $region36
        $region35: #{spatial_attention.1} parent=27 // pred_region
          %175 = dma.done %s168, 256
        $region36: #{spatial_attention.1} parent=27 // pred_fallthru
          _
        %176 = sfence
        %p177 = pneg %p48
        %p178 = pneg %p45
        %s179 = sand.u32 %s63, 1
        %s180 = scalar_lea.sflag [#allocation4], %s179
        %s181 = sand.u32 %s63, 1
        %s182 = smul.addr %s181, 16
        %s183 = scalar_lea.vmem [#allocation7], %s182
        %p184 = pneg %p76
        %p185 = pneg %p73
        %p186 = pneg %p102
        %p187 = pneg %p99
        %s188 = sand.u32 %s89, 1
        %s189 = scalar_lea.sflag [#allocation5], %s188
        %s190 = sand.u32 %s89, 1
        %s191 = smul.addr %s190, 16
        %s192 = scalar_lea.vmem [#allocation8], %s191
        %s193 = smul.u32 2, %s25
        %v194 = vld [vmem:[%s171] sm:$0xf]
        %v195 = vld [vmem:[%s171 + $0x4] sm:$0xf]
        %v196 = vld [vmem:[%s171 + $0x8] sm:$0xf]
        %v197 = vld [vmem:[%s171 + $0xc] sm:$0xf]
        %v198 = vunpack.c.l.bf16 %v194
        %v199 = vunpack.c.l.bf16 %v195
        %v200 = vunpack.c.l.bf16 %v196
        %v201 = vunpack.c.l.bf16 %v197
        %vm202 = vcmask 130048
        %v203 = vsel %vm202, %v198, 0.0
        %v204 = vsel %vm202, %v200, 0.0
        %v205 = vadd.f32 %v203, %v204
        %v206 = vsel %vm202, %v199, 0.0
        %v207 = vsel %vm202, %v201, 0.0
        %v208 = vadd.f32 %v206, %v207
        %v209 = vsel %vm202, %v198, -inf
        %v210 = vsel %vm202, %v200, -inf
        %v211 = vmax.f32 %v209, %v210
        %v212 = vsel %vm202, %v199, -inf
        %v213 = vsel %vm202, %v201, -inf
        %v214 = vmax.f32 %v212, %v213
        %p215 = scmp.eq.s32.totalorder %s25, 0
        // Predicated region
        $region37: #{spatial_attention.1} parent=27 // pred_check
          %p216 = pneg %p215
        $region38: #{spatial_attention.1} parent=27 // pred_check_branch
          %218 = sbr.rel (%p216) target = $region40
        $region39: #{spatial_attention.1} parent=27 // pred_region
          %219 = vst [vmem:[#allocation2] sm:$0x7] 0.0
          %220 = vst [vmem:[#allocation2 + $0x13] sm:$0x7] 0.0
          %vm221 = vcmask 23552
          %222 = vst.msk [vmem:[#allocation2] sm:$0xff] %vm221, 0.0
          %223 = vst.msk [vmem:[#allocation2 + $0x8] sm:$0xff] %vm221, 0.0
          %vm224 = vcmask 21504
          %225 = vst.msk [vmem:[#allocation2 + $0x10] sm:$0x3f] %vm224, 0.0
          %vm226 = vcmask 1047704
          %227 = vst.msk [vmem:[#allocation2] sm:$0xff] %vm226, 0.0
          %228 = vst.msk [vmem:[#allocation2 + $0x8] sm:$0xff] %vm226, 0.0
          %vm229 = vcmask 1045656
          %230 = vst.msk [vmem:[#allocation2 + $0x10] sm:$0x3f] %vm229, 0.0
          %s231 = scalar_lea.vmem [#allocation2], 24
          %232 = vst [vmem:[%s231] sm:$0x7] 0.0
          %233 = vst [vmem:[%s231 + $0x13] sm:$0x7] 0.0
          %234 = vst.msk [vmem:[%s231] sm:$0xff] %vm221, 0.0
          %235 = vst.msk [vmem:[%s231 + $0x8] sm:$0xff] %vm221, 0.0
          %236 = vst.msk [vmem:[%s231 + $0x10] sm:$0x3f] %vm224, 0.0
          %237 = vst.msk [vmem:[%s231] sm:$0xff] %vm226, 0.0
          %238 = vst.msk [vmem:[%s231 + $0x8] sm:$0xff] %vm226, 0.0
          %239 = vst.msk [vmem:[%s231 + $0x10] sm:$0x3f] %vm229, 0.0
          %242 = vrot.lane.b32.xlu0 %v205, 3
          %v243 = vpop.permute.xlu0 %242
          %244 = vrot.lane.b32.xlu0 %v208, 3
          %v245 = vpop.permute.xlu0 %244
          %vm248 = vcmask 154648
          %249 = vst.msk [vmem:[#allocation2 + $0x3] sm:$0xff] %vm248, %v243
          %250 = vst.msk [vmem:[#allocation2 + $0xb] sm:$0xff] %vm248, %v245
          %253 = vrot.lane.b32.xlu0 %v211, 3
          %v254 = vpop.permute.xlu0 %253
          %255 = vrot.lane.b32.xlu0 %v214, 3
          %v256 = vpop.permute.xlu0 %255
          %259 = vst.msk [vmem:[%s231 + $0x3] sm:$0xff] %vm248, %v254
          %260 = vst.msk [vmem:[%s231 + $0xb] sm:$0xff] %vm248, %v256
        $region40: #{spatial_attention.1} parent=27 // pred_fallthru
          _
        %p261 = scmp.gt.s32.totalorder %s25, 0
        // Predicated region
        $region41: #{spatial_attention.1} parent=27 // pred_check
          %p262 = pneg %p261
        $region42: #{spatial_attention.1} parent=27 // pred_check_branch
          %264 = sbr.rel (%p262) target = $region44
        $region43: #{spatial_attention.1} parent=27 // pred_region
          %v265 = vld [vmem:[#allocation2 + $0x3] sm:$0xff]
          %v266 = vld [vmem:[#allocation2 + $0xb] sm:$0xff]
          %s267 = scalar_lea.vmem [#allocation2], 24
          %v268 = vld [vmem:[%s267 + $0x3] sm:$0xff]
          %v269 = vld [vmem:[%s267 + $0xb] sm:$0xff]
          %272 = vrot.lane.b32.xlu0 %v205, 3
          %v273 = vpop.permute.xlu0 %272
          %274 = vrot.lane.b32.xlu0 %v208, 3
          %v275 = vpop.permute.xlu0 %274
          %v278 = vadd.f32 %v265, %v273
          %v279 = vadd.f32 %v266, %v275
          %vm280 = vcmask 154648
          %281 = vst.msk [vmem:[#allocation2 + $0x3] sm:$0xff] %vm280, %v278
          %282 = vst.msk [vmem:[#allocation2 + $0xb] sm:$0xff] %vm280, %v279
          %285 = vrot.lane.b32.xlu0 %v211, 3
          %v286 = vpop.permute.xlu0 %285
          %287 = vrot.lane.b32.xlu0 %v214, 3
          %v288 = vpop.permute.xlu0 %287
          %v291 = vmax.f32 %v268, %v286
          %v292 = vmax.f32 %v269, %v288
          %293 = vst.msk [vmem:[%s267 + $0x3] sm:$0xff] %vm280, %v291
          %294 = vst.msk [vmem:[%s267 + $0xb] sm:$0xff] %vm280, %v292
        $region44: #{spatial_attention.1} parent=27 // pred_fallthru
          _
        %p295 = scmp.eq.s32.totalorder %s25, 1
        // Predicated region
        $region45: #{spatial_attention.1} parent=27 // pred_check
          %p296 = pneg %p295
        $region46: #{spatial_attention.1} parent=27 // pred_check_branch
          %298 = sbr.rel (%p296) target = $region48
        $region47: #{spatial_attention.1} parent=27 // pred_region
          loop: start=0, step=1, limit=2
          $region49: #{spatial_attention.1} parent=47 // loop_pre_header
            _
          $region50: #{spatial_attention.1} parent=47 // loop_header
            %s300 = sphi 0, %s304
            %p301 = scmp.ge.s32.totalorder %s300, 2
          $region51: #{spatial_attention.1} parent=47 // loop_header_branch
            %303 = sbr.rel (%p301) target = $region55
          $region52: #{spatial_attention.1} parent=47 // loop_body
            %s305 = smul.u32 %s300, 8
            %p306 = scmp.lt.s32.totalorder %s305, 8
            %s307 = scalar_select %p306, %s305, 8
            %s308 = scalar_lea.vmem [#allocation2], %s307
            %v309 = vld [vmem:[%s308] sm:$0xff]
            %s310 = sld [smem:[#allocation3]]
            %v311 = vstv %s310
            %v312 = vmul.f32 %v311, %v309
            %v313 = vadd.f32 %v312, 0.0
            %s314 = sld [smem:[#allocation3 + $0x1]]
            %v315 = vstv %s314
            %v316 = vmul.f32 %v315, %v309
            %318 = vrot.lane.b32.xlu0 %v316, 127
            %v319 = vpop.permute.xlu0 %318
            %v321 = vadd.f32 %v313, %v319
            %s322 = sld [smem:[#allocation3 + $0x2]]
            %v323 = vstv %s322
            %v324 = vmul.f32 %v323, %v309
            %326 = vrot.lane.b32.xlu0 %v324, 126
            %v327 = vpop.permute.xlu0 %326
            %v329 = vadd.f32 %v321, %v327
            %s330 = sld [smem:[#allocation3 + $0x3]]
            %v331 = vstv %s330
            %v332 = vmul.f32 %v331, %v309
            %334 = vrot.lane.b32.xlu0 %v332, 125
            %v335 = vpop.permute.xlu0 %334
            %v337 = vadd.f32 %v329, %v335
            %s338 = sld [smem:[#allocation3 + $0x4]]
            %v339 = vstv %s338
            %v340 = vmul.f32 %v339, %v309
            %342 = vrot.lane.b32.xlu0 %v340, 124
            %v343 = vpop.permute.xlu0 %342
            %v345 = vadd.f32 %v337, %v343
            %s346 = sld [smem:[#allocation3 + $0x5]]
            %v347 = vstv %s346
            %v348 = vmul.f32 %v347, %v309
            %350 = vrot.lane.b32.xlu0 %v348, 123
            %v351 = vpop.permute.xlu0 %350
            %v353 = vadd.f32 %v345, %v351
            %s354 = sld [smem:[#allocation3 + $0x6]]
            %v355 = vstv %s354
            %v356 = vmul.f32 %v355, %v309
            %358 = vrot.lane.b32.xlu0 %v356, 122
            %v359 = vpop.permute.xlu0 %358
            %v361 = vadd.f32 %v353, %v359
            %s362 = sadd.s32 %s307, 1
            %s363 = scalar_lea.vmem [#allocation2], %s362
            %v364 = vld [vmem:[%s363] sm:$0xff]
            %s365 = sld [smem:[#allocation3 + $0x7]]
            %v366 = vstv %s365
            %v367 = vmul.f32 %v366, %v364
            %v368 = vadd.f32 %v361, %v367
            %s369 = sld [smem:[#allocation3 + $0x8]]
            %v370 = vstv %s369
            %v371 = vmul.f32 %v370, %v364
            %373 = vrot.lane.b32.xlu0 %v371, 127
            %v374 = vpop.permute.xlu0 %373
            %v376 = vadd.f32 %v368, %v374
            %s377 = sld [smem:[#allocation3 + $0x9]]
            %v378 = vstv %s377
            %v379 = vmul.f32 %v378, %v364
            %381 = vrot.lane.b32.xlu0 %v379, 126
            %v382 = vpop.permute.xlu0 %381
            %v384 = vadd.f32 %v376, %v382
            %s385 = sld [smem:[#allocation3 + $0xa]]
            %v386 = vstv %s385
            %v387 = vmul.f32 %v386, %v364
            %389 = vrot.lane.b32.xlu0 %v387, 125
            %v390 = vpop.permute.xlu0 %389
            %v392 = vadd.f32 %v384, %v390
            %s393 = sld [smem:[#allocation3 + $0xb]]
            %v394 = vstv %s393
            %v395 = vmul.f32 %v394, %v364
            %397 = vrot.lane.b32.xlu0 %v395, 124
            %v398 = vpop.permute.xlu0 %397
            %v400 = vadd.f32 %v392, %v398
            %s401 = sld [smem:[#allocation3 + $0xc]]
            %v402 = vstv %s401
            %v403 = vmul.f32 %v402, %v364
            %405 = vrot.lane.b32.xlu0 %v403, 123
            %v406 = vpop.permute.xlu0 %405
            %v408 = vadd.f32 %v400, %v406
            %s409 = sld [smem:[#allocation3 + $0xd]]
            %v410 = vstv %s409
            %v411 = vmul.f32 %v410, %v364
            %413 = vrot.lane.b32.xlu0 %v411, 122
            %v414 = vpop.permute.xlu0 %413
            %v416 = vadd.f32 %v408, %v414
            %s417 = sadd.s32 %s307, 2
            %s418 = scalar_lea.vmem [#allocation2], %s417
            %v419 = vld [vmem:[%s418] sm:$0xff]
            %s420 = sld [smem:[#allocation3 + $0xe]]
            %v421 = vstv %s420
            %v422 = vmul.f32 %v421, %v419
            %v423 = vadd.f32 %v416, %v422
            %s424 = sld [smem:[#allocation3 + $0xf]]
            %v425 = vstv %s424
            %v426 = vmul.f32 %v425, %v419
            %428 = vrot.lane.b32.xlu0 %v426, 127
            %v429 = vpop.permute.xlu0 %428
            %v431 = vadd.f32 %v423, %v429
            %s432 = sld [smem:[#allocation3 + $0x10]]
            %v433 = vstv %s432
            %v434 = vmul.f32 %v433, %v419
            %436 = vrot.lane.b32.xlu0 %v434, 126
            %v437 = vpop.permute.xlu0 %436
            %v439 = vadd.f32 %v431, %v437
            %s440 = sld [smem:[#allocation3 + $0x11]]
            %v441 = vstv %s440
            %v442 = vmul.f32 %v441, %v419
            %444 = vrot.lane.b32.xlu0 %v442, 125
            %v445 = vpop.permute.xlu0 %444
            %v447 = vadd.f32 %v439, %v445
            %s448 = sld [smem:[#allocation3 + $0x12]]
            %v449 = vstv %s448
            %v450 = vmul.f32 %v449, %v419
            %452 = vrot.lane.b32.xlu0 %v450, 124
            %v453 = vpop.permute.xlu0 %452
            %v455 = vadd.f32 %v447, %v453
            %s456 = sld [smem:[#allocation3 + $0x13]]
            %v457 = vstv %s456
            %v458 = vmul.f32 %v457, %v419
            %460 = vrot.lane.b32.xlu0 %v458, 123
            %v461 = vpop.permute.xlu0 %460
            %v463 = vadd.f32 %v455, %v461
            %s464 = sld [smem:[#allocation3 + $0x14]]
            %v465 = vstv %s464
            %v466 = vmul.f32 %v465, %v419
            %468 = vrot.lane.b32.xlu0 %v466, 122
            %v469 = vpop.permute.xlu0 %468
            %v471 = vadd.f32 %v463, %v469
            %s472 = sadd.s32 %s307, 3
            %s473 = scalar_lea.vmem [#allocation2], %s472
            %v474 = vld [vmem:[%s473] sm:$0xff]
            %s475 = sld [smem:[#allocation3 + $0x15]]
            %v476 = vstv %s475
            %v477 = vmul.f32 %v476, %v474
            %v478 = vadd.f32 %v471, %v477
            %s479 = sld [smem:[#allocation3 + $0x16]]
            %v480 = vstv %s479
            %v481 = vmul.f32 %v480, %v474
            %483 = vrot.lane.b32.xlu0 %v481, 127
            %v484 = vpop.permute.xlu0 %483
            %v486 = vadd.f32 %v478, %v484
            %s487 = sld [smem:[#allocation3 + $0x17]]
            %v488 = vstv %s487
            %v489 = vmul.f32 %v488, %v474
            %491 = vrot.lane.b32.xlu0 %v489, 126
            %v492 = vpop.permute.xlu0 %491
            %v494 = vadd.f32 %v486, %v492
            %s495 = sld [smem:[#allocation3 + $0x18]]
            %v496 = vstv %s495
            %v497 = vmul.f32 %v496, %v474
            %499 = vrot.lane.b32.xlu0 %v497, 125
            %v500 = vpop.permute.xlu0 %499
            %v502 = vadd.f32 %v494, %v500
            %s503 = sld [smem:[#allocation3 + $0x19]]
            %v504 = vstv %s503
            %v505 = vmul.f32 %v504, %v474
            %507 = vrot.lane.b32.xlu0 %v505, 124
            %v508 = vpop.permute.xlu0 %507
            %v510 = vadd.f32 %v502, %v508
            %s511 = sld [smem:[#allocation3 + $0x1a]]
            %v512 = vstv %s511
            %v513 = vmul.f32 %v512, %v474
            %515 = vrot.lane.b32.xlu0 %v513, 123
            %v516 = vpop.permute.xlu0 %515
            %v518 = vadd.f32 %v510, %v516
            %s519 = sld [smem:[#allocation3 + $0x1b]]
            %v520 = vstv %s519
            %v521 = vmul.f32 %v520, %v474
            %523 = vrot.lane.b32.xlu0 %v521, 122
            %v524 = vpop.permute.xlu0 %523
            %v526 = vadd.f32 %v518, %v524
            %s527 = sadd.s32 %s307, 4
            %s528 = scalar_lea.vmem [#allocation2], %s527
            %v529 = vld [vmem:[%s528] sm:$0xff]
            %s530 = sld [smem:[#allocation3 + $0x1c]]
            %v531 = vstv %s530
            %v532 = vmul.f32 %v531, %v529
            %v533 = vadd.f32 %v526, %v532
            %s534 = sld [smem:[#allocation3 + $0x1d]]
            %v535 = vstv %s534
            %v536 = vmul.f32 %v535, %v529
            %538 = vrot.lane.b32.xlu0 %v536, 127
            %v539 = vpop.permute.xlu0 %538
            %v541 = vadd.f32 %v533, %v539
            %s542 = sld [smem:[#allocation3 + $0x1e]]
            %v543 = vstv %s542
            %v544 = vmul.f32 %v543, %v529
            %546 = vrot.lane.b32.xlu0 %v544, 126
            %v547 = vpop.permute.xlu0 %546
            %v549 = vadd.f32 %v541, %v547
            %s550 = sld [smem:[#allocation3 + $0x1f]]
            %v551 = vstv %s550
            %v552 = vmul.f32 %v551, %v529
            %554 = vrot.lane.b32.xlu0 %v552, 125
            %v555 = vpop.permute.xlu0 %554
            %v557 = vadd.f32 %v549, %v555
            %s558 = sld [smem:[#allocation3 + $0x20]]
            %v559 = vstv %s558
            %v560 = vmul.f32 %v559, %v529
            %562 = vrot.lane.b32.xlu0 %v560, 124
            %v563 = vpop.permute.xlu0 %562
            %v565 = vadd.f32 %v557, %v563
            %s566 = sld [smem:[#allocation3 + $0x21]]
            %v567 = vstv %s566
            %v568 = vmul.f32 %v567, %v529
            %570 = vrot.lane.b32.xlu0 %v568, 123
            %v571 = vpop.permute.xlu0 %570
            %v573 = vadd.f32 %v565, %v571
            %s574 = sld [smem:[#allocation3 + $0x22]]
            %v575 = vstv %s574
            %v576 = vmul.f32 %v575, %v529
            %578 = vrot.lane.b32.xlu0 %v576, 122
            %v579 = vpop.permute.xlu0 %578
            %v581 = vadd.f32 %v573, %v579
            %s582 = sadd.s32 %s307, 5
            %s583 = scalar_lea.vmem [#allocation2], %s582
            %v584 = vld [vmem:[%s583] sm:$0xff]
            %s585 = sld [smem:[#allocation3 + $0x23]]
            %v586 = vstv %s585
            %v587 = vmul.f32 %v586, %v584
            %v588 = vadd.f32 %v581, %v587
            %s589 = sld [smem:[#allocation3 + $0x24]]
            %v590 = vstv %s589
            %v591 = vmul.f32 %v590, %v584
            %593 = vrot.lane.b32.xlu0 %v591, 127
            %v594 = vpop.permute.xlu0 %593
            %v596 = vadd.f32 %v588, %v594
            %s597 = sld [smem:[#allocation3 + $0x25]]
            %v598 = vstv %s597
            %v599 = vmul.f32 %v598, %v584
            %601 = vrot.lane.b32.xlu0 %v599, 126
            %v602 = vpop.permute.xlu0 %601
            %v604 = vadd.f32 %v596, %v602
            %s605 = sld [smem:[#allocation3 + $0x26]]
            %v606 = vstv %s605
            %v607 = vmul.f32 %v606, %v584
            %609 = vrot.lane.b32.xlu0 %v607, 125
            %v610 = vpop.permute.xlu0 %609
            %v612 = vadd.f32 %v604, %v610
            %s613 = sld [smem:[#allocation3 + $0x27]]
            %v614 = vstv %s613
            %v615 = vmul.f32 %v614, %v584
            %617 = vrot.lane.b32.xlu0 %v615, 124
            %v618 = vpop.permute.xlu0 %617
            %v620 = vadd.f32 %v612, %v618
            %s621 = sld [smem:[#allocation3 + $0x28]]
            %v622 = vstv %s621
            %v623 = vmul.f32 %v622, %v584
            %625 = vrot.lane.b32.xlu0 %v623, 123
            %v626 = vpop.permute.xlu0 %625
            %v628 = vadd.f32 %v620, %v626
            %s629 = sld [smem:[#allocation3 + $0x29]]
            %v630 = vstv %s629
            %v631 = vmul.f32 %v630, %v584
            %633 = vrot.lane.b32.xlu0 %v631, 122
            %v634 = vpop.permute.xlu0 %633
            %v636 = vadd.f32 %v628, %v634
            %s637 = sadd.s32 %s307, 6
            %s638 = scalar_lea.vmem [#allocation2], %s637
            %v639 = vld [vmem:[%s638] sm:$0xff]
            %s640 = sld [smem:[#allocation3 + $0x2a]]
            %v641 = vstv %s640
            %v642 = vmul.f32 %v641, %v639
            %v643 = vadd.f32 %v636, %v642
            %s644 = sld [smem:[#allocation3 + $0x2b]]
            %v645 = vstv %s644
            %v646 = vmul.f32 %v645, %v639
            %648 = vrot.lane.b32.xlu0 %v646, 127
            %v649 = vpop.permute.xlu0 %648
            %v651 = vadd.f32 %v643, %v649
            %s652 = sld [smem:[#allocation3 + $0x2c]]
            %v653 = vstv %s652
            %v654 = vmul.f32 %v653, %v639
            %656 = vrot.lane.b32.xlu0 %v654, 126
            %v657 = vpop.permute.xlu0 %656
            %v659 = vadd.f32 %v651, %v657
            %s660 = sld [smem:[#allocation3 + $0x2d]]
            %v661 = vstv %s660
            %v662 = vmul.f32 %v661, %v639
            %664 = vrot.lane.b32.xlu0 %v662, 125
            %v665 = vpop.permute.xlu0 %664
            %v667 = vadd.f32 %v659, %v665
            %s668 = sld [smem:[#allocation3 + $0x2e]]
            %v669 = vstv %s668
            %v670 = vmul.f32 %v669, %v639
            %672 = vrot.lane.b32.xlu0 %v670, 124
            %v673 = vpop.permute.xlu0 %672
            %v675 = vadd.f32 %v667, %v673
            %s676 = sld [smem:[#allocation3 + $0x2f]]
            %v677 = vstv %s676
            %v678 = vmul.f32 %v677, %v639
            %680 = vrot.lane.b32.xlu0 %v678, 123
            %v681 = vpop.permute.xlu0 %680
            %v683 = vadd.f32 %v675, %v681
            %s684 = sld [smem:[#allocation3 + $0x30]]
            %v685 = vstv %s684
            %v686 = vmul.f32 %v685, %v639
            %688 = vrot.lane.b32.xlu0 %v686, 122
            %v689 = vpop.permute.xlu0 %688
            %v691 = vadd.f32 %v683, %v689
            %s692 = sadd.s32 %s307, 24
            %s693 = scalar_lea.vmem [#allocation2], %s692
            %v694 = vld [vmem:[%s693] sm:$0xff]
            %s695 = sld [smem:[#allocation3 + $0x31]]
            %v696 = vstv %s695
            %v697 = vmul.f32 %v696, %v694
            %v698 = vadd.f32 %v691, %v697
            %s699 = sld [smem:[#allocation3 + $0x32]]
            %v700 = vstv %s699
            %v701 = vmul.f32 %v700, %v694
            %703 = vrot.lane.b32.xlu0 %v701, 127
            %v704 = vpop.permute.xlu0 %703
            %v706 = vadd.f32 %v698, %v704
            %s707 = sld [smem:[#allocation3 + $0x33]]
            %v708 = vstv %s707
            %v709 = vmul.f32 %v708, %v694
            %711 = vrot.lane.b32.xlu0 %v709, 126
            %v712 = vpop.permute.xlu0 %711
            %v714 = vadd.f32 %v706, %v712
            %s715 = sld [smem:[#allocation3 + $0x34]]
            %v716 = vstv %s715
            %v717 = vmul.f32 %v716, %v694
            %719 = vrot.lane.b32.xlu0 %v717, 125
            %v720 = vpop.permute.xlu0 %719
            %v722 = vadd.f32 %v714, %v720
            %s723 = sld [smem:[#allocation3 + $0x35]]
            %v724 = vstv %s723
            %v725 = vmul.f32 %v724, %v694
            %727 = vrot.lane.b32.xlu0 %v725, 124
            %v728 = vpop.permute.xlu0 %727
            %v730 = vadd.f32 %v722, %v728
            %s731 = sld [smem:[#allocation3 + $0x36]]
            %v732 = vstv %s731
            %v733 = vmul.f32 %v732, %v694
            %735 = vrot.lane.b32.xlu0 %v733, 123
            %v736 = vpop.permute.xlu0 %735
            %v738 = vadd.f32 %v730, %v736
            %s739 = sld [smem:[#allocation3 + $0x37]]
            %v740 = vstv %s739
            %v741 = vmul.f32 %v740, %v694
            %743 = vrot.lane.b32.xlu0 %v741, 122
            %v744 = vpop.permute.xlu0 %743
            %v746 = vadd.f32 %v738, %v744
            %s747 = sadd.s32 %s362, 24
            %s748 = scalar_lea.vmem [#allocation2], %s747
            %v749 = vld [vmem:[%s748] sm:$0xff]
            %s750 = sld [smem:[#allocation3 + $0x38]]
            %v751 = vstv %s750
            %v752 = vmul.f32 %v751, %v749
            %v753 = vadd.f32 %v746, %v752
            %s754 = sld [smem:[#allocation3 + $0x39]]
            %v755 = vstv %s754
            %v756 = vmul.f32 %v755, %v749
            %758 = vrot.lane.b32.xlu0 %v756, 127
            %v759 = vpop.permute.xlu0 %758
            %v761 = vadd.f32 %v753, %v759
            %s762 = sld [smem:[#allocation3 + $0x3a]]
            %v763 = vstv %s762
            %v764 = vmul.f32 %v763, %v749
            %766 = vrot.lane.b32.xlu0 %v764, 126
            %v767 = vpop.permute.xlu0 %766
            %v769 = vadd.f32 %v761, %v767
            %s770 = sld [smem:[#allocation3 + $0x3b]]
            %v771 = vstv %s770
            %v772 = vmul.f32 %v771, %v749
            %774 = vrot.lane.b32.xlu0 %v772, 125
            %v775 = vpop.permute.xlu0 %774
            %v777 = vadd.f32 %v769, %v775
            %s778 = sld [smem:[#allocation3 + $0x3c]]
            %v779 = vstv %s778
            %v780 = vmul.f32 %v779, %v749
            %782 = vrot.lane.b32.xlu0 %v780, 124
            %v783 = vpop.permute.xlu0 %782
            %v785 = vadd.f32 %v777, %v783
            %s786 = sld [smem:[#allocation3 + $0x3d]]
            %v787 = vstv %s786
            %v788 = vmul.f32 %v787, %v749
            %790 = vrot.lane.b32.xlu0 %v788, 123
            %v791 = vpop.permute.xlu0 %790
            %v793 = vadd.f32 %v785, %v791
            %s794 = sld [smem:[#allocation3 + $0x3e]]
            %v795 = vstv %s794
            %v796 = vmul.f32 %v795, %v749
            %798 = vrot.lane.b32.xlu0 %v796, 122
            %v799 = vpop.permute.xlu0 %798
            %v801 = vadd.f32 %v793, %v799
            %s802 = sadd.s32 %s417, 24
            %s803 = scalar_lea.vmem [#allocation2], %s802
            %v804 = vld [vmem:[%s803] sm:$0xff]
            %s805 = sld [smem:[#allocation3 + $0x3f]]
            %v806 = vstv %s805
            %v807 = vmul.f32 %v806, %v804
            %v808 = vadd.f32 %v801, %v807
            %s809 = sld [smem:[#allocation3 + $0x40]]
            %v810 = vstv %s809
            %v811 = vmul.f32 %v810, %v804
            %813 = vrot.lane.b32.xlu0 %v811, 127
            %v814 = vpop.permute.xlu0 %813
            %v816 = vadd.f32 %v808, %v814
            %s817 = sld [smem:[#allocation3 + $0x41]]
            %v818 = vstv %s817
            %v819 = vmul.f32 %v818, %v804
            %821 = vrot.lane.b32.xlu0 %v819, 126
            %v822 = vpop.permute.xlu0 %821
            %v824 = vadd.f32 %v816, %v822
            %s825 = sld [smem:[#allocation3 + $0x42]]
            %v826 = vstv %s825
            %v827 = vmul.f32 %v826, %v804
            %829 = vrot.lane.b32.xlu0 %v827, 125
            %v830 = vpop.permute.xlu0 %829
            %v832 = vadd.f32 %v824, %v830
            %s833 = sld [smem:[#allocation3 + $0x43]]
            %v834 = vstv %s833
            %v835 = vmul.f32 %v834, %v804
            %837 = vrot.lane.b32.xlu0 %v835, 124
            %v838 = vpop.permute.xlu0 %837
            %v840 = vadd.f32 %v832, %v838
            %s841 = sld [smem:[#allocation3 + $0x44]]
            %v842 = vstv %s841
            %v843 = vmul.f32 %v842, %v804
            %845 = vrot.lane.b32.xlu0 %v843, 123
            %v846 = vpop.permute.xlu0 %845
            %v848 = vadd.f32 %v840, %v846
            %s849 = sld [smem:[#allocation3 + $0x45]]
            %v850 = vstv %s849
            %v851 = vmul.f32 %v850, %v804
            %853 = vrot.lane.b32.xlu0 %v851, 122
            %v854 = vpop.permute.xlu0 %853
            %v856 = vadd.f32 %v848, %v854
            %s857 = sadd.s32 %s472, 24
            %s858 = scalar_lea.vmem [#allocation2], %s857
            %v859 = vld [vmem:[%s858] sm:$0xff]
            %s860 = sld [smem:[#allocation3 + $0x46]]
            %v861 = vstv %s860
            %v862 = vmul.f32 %v861, %v859
            %v863 = vadd.f32 %v856, %v862
            %s864 = sld [smem:[#allocation3 + $0x47]]
            %v865 = vstv %s864
            %v866 = vmul.f32 %v865, %v859
            %868 = vrot.lane.b32.xlu0 %v866, 127
            %v869 = vpop.permute.xlu0 %868
            %v871 = vadd.f32 %v863, %v869
            %s872 = sld [smem:[#allocation3 + $0x48]]
            %v873 = vstv %s872
            %v874 = vmul.f32 %v873, %v859
            %876 = vrot.lane.b32.xlu0 %v874, 126
            %v877 = vpop.permute.xlu0 %876
            %v879 = vadd.f32 %v871, %v877
            %s880 = sld [smem:[#allocation3 + $0x49]]
            %v881 = vstv %s880
            %v882 = vmul.f32 %v881, %v859
            %884 = vrot.lane.b32.xlu0 %v882, 125
            %v885 = vpop.permute.xlu0 %884
            %v887 = vadd.f32 %v879, %v885
            %s888 = sld [smem:[#allocation3 + $0x4a]]
            %v889 = vstv %s888
            %v890 = vmul.f32 %v889, %v859
            %892 = vrot.lane.b32.xlu0 %v890, 124
            %v893 = vpop.permute.xlu0 %892
            %v895 = vadd.f32 %v887, %v893
            %s896 = sld [smem:[#allocation3 + $0x4b]]
            %v897 = vstv %s896
            %v898 = vmul.f32 %v897, %v859
            %900 = vrot.lane.b32.xlu0 %v898, 123
            %v901 = vpop.permute.xlu0 %900
            %v903 = vadd.f32 %v895, %v901
            %s904 = sld [smem:[#allocation3 + $0x4c]]
            %v905 = vstv %s904
            %v906 = vmul.f32 %v905, %v859
            %908 = vrot.lane.b32.xlu0 %v906, 122
            %v909 = vpop.permute.xlu0 %908
            %v911 = vadd.f32 %v903, %v909
            %s912 = sadd.s32 %s527, 24
            %s913 = scalar_lea.vmem [#allocation2], %s912
            %v914 = vld [vmem:[%s913] sm:$0xff]
            %s915 = sld [smem:[#allocation3 + $0x4d]]
            %v916 = vstv %s915
            %v917 = vmul.f32 %v916, %v914
            %v918 = vadd.f32 %v911, %v917
            %s919 = sld [smem:[#allocation3 + $0x4e]]
            %v920 = vstv %s919
            %v921 = vmul.f32 %v920, %v914
            %923 = vrot.lane.b32.xlu0 %v921, 127
            %v924 = vpop.permute.xlu0 %923
            %v926 = vadd.f32 %v918, %v924
            %s927 = sld [smem:[#allocation3 + $0x4f]]
            %v928 = vstv %s927
            %v929 = vmul.f32 %v928, %v914
            %931 = vrot.lane.b32.xlu0 %v929, 126
            %v932 = vpop.permute.xlu0 %931
            %v934 = vadd.f32 %v926, %v932
            %s935 = sld [smem:[#allocation3 + $0x50]]
            %v936 = vstv %s935
            %v937 = vmul.f32 %v936, %v914
            %939 = vrot.lane.b32.xlu0 %v937, 125
            %v940 = vpop.permute.xlu0 %939
            %v942 = vadd.f32 %v934, %v940
            %s943 = sld [smem:[#allocation3 + $0x51]]
            %v944 = vstv %s943
            %v945 = vmul.f32 %v944, %v914
            %947 = vrot.lane.b32.xlu0 %v945, 124
            %v948 = vpop.permute.xlu0 %947
            %v950 = vadd.f32 %v942, %v948
            %s951 = sld [smem:[#allocation3 + $0x52]]
            %v952 = vstv %s951
            %v953 = vmul.f32 %v952, %v914
            %955 = vrot.lane.b32.xlu0 %v953, 123
            %v956 = vpop.permute.xlu0 %955
            %v958 = vadd.f32 %v950, %v956
            %s959 = sld [smem:[#allocation3 + $0x53]]
            %v960 = vstv %s959
            %v961 = vmul.f32 %v960, %v914
            %963 = vrot.lane.b32.xlu0 %v961, 122
            %v964 = vpop.permute.xlu0 %963
            %v966 = vadd.f32 %v958, %v964
            %s967 = sadd.s32 %s582, 24
            %s968 = scalar_lea.vmem [#allocation2], %s967
            %v969 = vld [vmem:[%s968] sm:$0xff]
            %s970 = sld [smem:[#allocation3 + $0x54]]
            %v971 = vstv %s970
            %v972 = vmul.f32 %v971, %v969
            %v973 = vadd.f32 %v966, %v972
            %s974 = sld [smem:[#allocation3 + $0x55]]
            %v975 = vstv %s974
            %v976 = vmul.f32 %v975, %v969
            %978 = vrot.lane.b32.xlu0 %v976, 127
            %v979 = vpop.permute.xlu0 %978
            %v981 = vadd.f32 %v973, %v979
            %s982 = sld [smem:[#allocation3 + $0x56]]
            %v983 = vstv %s982
            %v984 = vmul.f32 %v983, %v969
            %986 = vrot.lane.b32.xlu0 %v984, 126
            %v987 = vpop.permute.xlu0 %986
            %v989 = vadd.f32 %v981, %v987
            %s990 = sld [smem:[#allocation3 + $0x57]]
            %v991 = vstv %s990
            %v992 = vmul.f32 %v991, %v969
            %994 = vrot.lane.b32.xlu0 %v992, 125
            %v995 = vpop.permute.xlu0 %994
            %v997 = vadd.f32 %v989, %v995
            %s998 = sld [smem:[#allocation3 + $0x58]]
            %v999 = vstv %s998
            %v1000 = vmul.f32 %v999, %v969
            %1002 = vrot.lane.b32.xlu0 %v1000, 124
            %v1003 = vpop.permute.xlu0 %1002
            %v1005 = vadd.f32 %v997, %v1003
            %s1006 = sld [smem:[#allocation3 + $0x59]]
            %v1007 = vstv %s1006
            %v1008 = vmul.f32 %v1007, %v969
            %1010 = vrot.lane.b32.xlu0 %v1008, 123
            %v1011 = vpop.permute.xlu0 %1010
            %v1013 = vadd.f32 %v1005, %v1011
            %s1014 = sld [smem:[#allocation3 + $0x5a]]
            %v1015 = vstv %s1014
            %v1016 = vmul.f32 %v1015, %v969
            %1018 = vrot.lane.b32.xlu0 %v1016, 122
            %v1019 = vpop.permute.xlu0 %1018
            %v1021 = vadd.f32 %v1013, %v1019
            %s1022 = sadd.s32 %s637, 24
            %s1023 = scalar_lea.vmem [#allocation2], %s1022
            %v1024 = vld [vmem:[%s1023] sm:$0xff]
            %s1025 = sld [smem:[#allocation3 + $0x5b]]
            %v1026 = vstv %s1025
            %v1027 = vmul.f32 %v1026, %v1024
            %v1028 = vadd.f32 %v1021, %v1027
            %s1029 = sld [smem:[#allocation3 + $0x5c]]
            %v1030 = vstv %s1029
            %v1031 = vmul.f32 %v1030, %v1024
            %1033 = vrot.lane.b32.xlu0 %v1031, 127
            %v1034 = vpop.permute.xlu0 %1033
            %v1036 = vadd.f32 %v1028, %v1034
            %s1037 = sld [smem:[#allocation3 + $0x5d]]
            %v1038 = vstv %s1037
            %v1039 = vmul.f32 %v1038, %v1024
            %1041 = vrot.lane.b32.xlu0 %v1039, 126
            %v1042 = vpop.permute.xlu0 %1041
            %v1044 = vadd.f32 %v1036, %v1042
            %s1045 = sld [smem:[#allocation3 + $0x5e]]
            %v1046 = vstv %s1045
            %v1047 = vmul.f32 %v1046, %v1024
            %1049 = vrot.lane.b32.xlu0 %v1047, 125
            %v1050 = vpop.permute.xlu0 %1049
            %v1052 = vadd.f32 %v1044, %v1050
            %s1053 = sld [smem:[#allocation3 + $0x5f]]
            %v1054 = vstv %s1053
            %v1055 = vmul.f32 %v1054, %v1024
            %1057 = vrot.lane.b32.xlu0 %v1055, 124
            %v1058 = vpop.permute.xlu0 %1057
            %v1060 = vadd.f32 %v1052, %v1058
            %s1061 = sld [smem:[#allocation3 + $0x60]]
            %v1062 = vstv %s1061
            %v1063 = vmul.f32 %v1062, %v1024
            %1065 = vrot.lane.b32.xlu0 %v1063, 123
            %v1066 = vpop.permute.xlu0 %1065
            %v1068 = vadd.f32 %v1060, %v1066
            %s1069 = sld [smem:[#allocation3 + $0x61]]
            %v1070 = vstv %s1069
            %v1071 = vmul.f32 %v1070, %v1024
            %1073 = vrot.lane.b32.xlu0 %v1071, 122
            %v1074 = vpop.permute.xlu0 %1073
            %v1076 = vadd.f32 %v1068, %v1074
            %v1077 = vxor.u32 %v1076, 2147483648
            %v1078 = vmul.f32 %v1077, 1.442695
            %v1079 = vpow.pop %v1078
            %v1080 = vadd.f32 %v1079, 1.0
            %v1081 = vrcp.pop %v1080
            %v1082 = vmul.f32 1.0, %v1081
            %s1083 = scalar_lea.vmem %s192, %s307 [#allocation8]
            %1084 = vst.msk [vmem:[%s1083] sm:$0xff] %vm202, %v1082
          $region53: #{spatial_attention.1} parent=47 // loop_footer
            %s304 = sadd.s32 1, %s300
          $region54: #{spatial_attention.1} parent=47 // loop_footer_branch
            %299 = sbr.rel target = $region50
          $region55: #{spatial_attention.1} parent=47 // loop_exit
            _
        $region48: #{spatial_attention.1} parent=27 // pred_fallthru
          _
        %s1085 = sand.u32 %s89, 1
        %s1086 = scalar_lea.sflag [#allocation5], %s1085
        %s1087 = sand.u32 %s89, 1
        %s1088 = smul.addr %s1087, 16
        %s1089 = scalar_lea.vmem [#allocation8], %s1088
        // Predicated region
        $region56: #{spatial_attention.1} parent=27 // pred_check
          %p1090 = pneg %p99
        $region57: #{spatial_attention.1} parent=27 // pred_check_branch
          %1092 = sbr.rel (%p1090) target = $region59
        $region58: #{spatial_attention.1} parent=27 // pred_region
          %s1094 = ssub.s32 256, 256
          %1095 = vsyncadd %s1086, %s1094
          %s1096 = smul.addr %s24, 2
          %s1097 = smul.addr %s1096, 128
          %s1098 = scalar_lea.hbm %s2, %s1097
          %s1099 = sshll.u32 %s1089, 4
          %s1100 = int_to_ptr.vmem [resolvable:$true] %s1099
          %1105 = dma.vmem_to_hbm [thread:$0]  %s1100, 256, %s1098, %s1086, 128, 128, 8
        $region59: #{spatial_attention.1} parent=27 // pred_fallthru
          _
      $region28: #{spatial_attention.1} parent=5 // pred_fallthru
        _
      %p1106 = scmp.le.s32.totalorder 2, %s15
      // Predicated region
      $region60: #{spatial_attention.1} parent=5 // pred_check
        %p1107 = pneg %p1106
      $region61: #{spatial_attention.1} parent=5 // pred_check_branch
        %1109 = sbr.rel (%p1107) target = $region63
      $region62: #{spatial_attention.1} parent=5 // pred_region
        %s1110 = ssub.s32 %s15, 2
        // Predicated region
        $region64: #{spatial_attention.1} parent=62 // pred_check
          %p1111 = pneg %p105
        $region65: #{spatial_attention.1} parent=62 // pred_check_branch
          %1113 = sbr.rel (%p1111) target = $region67
        $region66: #{spatial_attention.1} parent=62 // pred_region
          %s1114 = sand.u32 %s90, 1
          %s1115 = scalar_lea.sflag [#allocation5], %s1114
          %s1116 = sand.u32 %s90, 1
          %s1117 = smul.addr %s1116, 16
          %s1118 = scalar_lea.vmem [#allocation8], %s1117
          %1119 = dma.done %s1115, 256
        $region67: #{spatial_attention.1} parent=62 // pred_fallthru
          _
      $region63: #{spatial_attention.1} parent=5 // pred_fallthru
        _
    $region6: #{spatial_attention.1} parent=1 // loop_footer
      %s19 = sadd.s32 1, %s15
    $region7: #{spatial_attention.1} parent=1 // loop_footer_branch
      %14 = sbr.rel target = $region3
    $region8: #{spatial_attention.1} parent=1 // loop_exit
      _
    %1120 = vsyncpa [#allocation4], 1
    %s1121 = scalar_lea.sflag [#allocation4], 1
    %1122 = vsyncpa %s1121, 1
    %1123 = vsyncpa [#allocation5], 1
    %s1124 = scalar_lea.sflag [#allocation5], 1
    %1125 = vsyncpa %s1124, 1
    %1126 = vsyncpa [#allocation6], 1
    %s1127 = scalar_lea.sflag [#allocation6], 1
    %1128 = vsyncpa %s1127, 1

</llo_original>
